<compile_context>
chip_gen: v7x
topology: tpu7x:2x2x1
jax: 0.10.0
libtpu: 0.0.40
codegen_flags: <defaults>
</compile_context>

<pallas_src>
import math

import jax
import jax.numpy as jnp
from jax import lax
from jax.experimental import pallas as pl
from jax.experimental.pallas import tpu as pltpu


_HALO = 16  # left-halo rows in padded VMEM activation scratch (body starts tile-aligned)


def _same_pad(k):
    """'same' padding of conv1d_same_padding for stride=1, dilation=1."""
    total = k - 1
    left = total // 2
    return left, total - left


def _pick_batch_block(n, target=8):
    """Batch elements per grid step: fill the MXU M dim but keep >=2 grid steps."""
    if n >= 2 * target:
        return target
    if n >= 2:
        return max(1, n // 2)
    return 1


# ------------------------------ Pallas kernel ------------------------------ #

def _build_kernel(B, L, Lp, K2, K3):
    """Returns the fused kernel for a (B, L) batch block.

    Lp is L rounded up to a multiple of 16 so all (B, Lp, C) <-> (B*Lp, C)
    reshapes are pure vreg relabels (bf16 sublane tile = 16).
    """
    pad_l2 = (K2 - 1) // 2
    pad_r2 = (K2 - 1) - pad_l2
    pad_l3 = (K3 - 1) // 2
    pad_r3 = (K3 - 1) - pad_l3
    BLp = B * Lp

    def kernel(x1_ref, w1_ref, s1_ref, w2_ref, s2_ref, w3_ref, s3_ref,
               fcw_ref, fcb_ref, o_ref, a1_ref, a2_ref):
        # x1_ref : (B*Lp, K1*C_in) bf16  host-built im2col of the raw input
        # w*_ref : BN-scale-folded conv weights in im2col layout (bf16)
        # s*_ref : (1, C_out) f32 BN shifts
        # fcw_ref: (128, NC_pad) f32 final Linear weight with 1/L folded in
        # o_ref  : (1, B, NC_pad) f32
        # a1_ref : (B, _HALO + Lp + pad_r2, 128) bf16 scratch (block-1 act, padded)
        # a2_ref : (B, _HALO + Lp + pad_r3, 256) bf16 scratch (block-2 act, padded)
        c1 = a1_ref.shape[2]
        c2 = a2_ref.shape[2]

        # ---------------- Block 1: Conv(k=8) as one (B*Lp)-row im2col matmul ----
        acc1 = jnp.dot(x1_ref[...], w1_ref[...], preferred_element_type=jnp.float32)
        a1 = jnp.maximum(acc1 + s1_ref[...], 0.0)                       # (B*Lp, 128)
        a1_ref[:, pl.ds(_HALO, Lp), :] = a1.astype(a1_ref.dtype).reshape(B, Lp, c1)
        # Zero ONLY the halo rows block 2 reads (every step: megacore-safe).
        if pad_l2 > 0:
            a1_ref[:, pl.ds(_HALO - pad_l2, pad_l2), :] = jnp.zeros(
                (B, pad_l2, c1), a1_ref.dtype)
        tail1 = (Lp - L) + pad_r2
        if tail1 > 0:
            a1_ref[:, pl.ds(_HALO + L, tail1), :] = jnp.zeros(
                (B, tail1, c1), a1_ref.dtype)

        # ---------------- Block 2: Conv(k=5) as K2 accumulated shifted dots -----
        acc2 = None
        for k in range(K2):
            sl = a1_ref[:, pl.ds(_HALO - pad_l2 + k, Lp), :].reshape(BLp, c1)
            d = jnp.dot(sl, w2_ref[k * c1:(k + 1) * c1, :],
                        preferred_element_type=jnp.float32)
            acc2 = d if acc2 is None else acc2 + d
        a2 = jnp.maximum(acc2 + s2_ref[...], 0.0)                       # (B*Lp, 256)
        a2_ref[:, pl.ds(_HALO, Lp), :] = a2.astype(a2_ref.dtype).reshape(B, Lp, c2)
        if pad_l3 > 0:
            a2_ref[:, pl.ds(_HALO - pad_l3, pad_l3), :] = jnp.zeros(
                (B, pad_l3, c2), a2_ref.dtype)
        tail2 = (Lp - L) + pad_r3
        if tail2 > 0:
            a2_ref[:, pl.ds(_HALO + L, tail2), :] = jnp.zeros(
                (B, tail2, c2), a2_ref.dtype)

        # ---------------- Block 3: Conv(k=3) as K3 accumulated shifted dots -----
        acc3 = None
        for k in range(K3):
            sl = a2_ref[:, pl.ds(_HALO - pad_l3 + k, Lp), :].reshape(BLp, c2)
            d = jnp.dot(sl, w3_ref[k * c2:(k + 1) * c2, :],
                        preferred_element_type=jnp.float32)
            acc3 = d if acc3 is None else acc3 + d
        a3 = jnp.maximum(acc3 + s3_ref[...], 0.0)                       # (B*Lp, 128) f32

        # ---------------- mean over L (1/L folded into fcw) + Linear head -------
        c3 = a3.shape[-1]
        a3_b = a3.reshape(B, Lp, c3)
        if Lp != L:   # mask the Lp-L padded rows out of the pooled sum
            row = lax.broadcasted_iota(jnp.int32, (B, Lp, c3), 1)
            a3_b = jnp.where(row < L, a3_b, 0.0)
        pooled = jnp.sum(a3_b, axis=1)                                  # (B, 128)
        logits = jnp.dot(pooled, fcw_ref[...],
                         preferred_element_type=jnp.float32) + fcb_ref[...]
        o_ref[0] = logits.astype(o_ref.dtype)

    return kernel


# ------------------------------ JAX wrapper --------------------------------- #

def _fold_bn_into_weight(blk, eps=1e-5):
    """Fold BN(eval) scale into the conv weight (im2col layout) -> (W, shift)."""
    w = blk["w"].astype(jnp.float32)                       # (C_out, C_in, K)
    c_out, c_in, k = w.shape
    s = blk["gamma"] / jnp.sqrt(blk["var"] + eps)          # (C_out,)
    w_im2col = jnp.transpose(w, (2, 1, 0)).reshape(k * c_in, c_out)
    w_folded = (w_im2col * s[None, :]).astype(jnp.bfloat16)
    shift = ((blk["b"] - blk["mean"]) * s + blk["beta"]).astype(jnp.float32)
    return w_folded, shift[None, :]


def fcn_forward(params, x_ncl, batch_block=None):
    """PyTorch-style input (N, C_in, L) -> (N, num_classes)."""
    N, C_in, L = x_ncl.shape
    blocks = params["blocks"]
    K1 = blocks[0]["w"].shape[2]
    K2 = blocks[1]["w"].shape[2]
    K3 = blocks[2]["w"].shape[2]
    c1 = blocks[0]["w"].shape[0]            # 128
    c2 = blocks[1]["w"].shape[0]            # 256
    c3 = blocks[2]["w"].shape[0]            # 128
    pad_l1, pad_r1 = _same_pad(K1)
    _, pad_r2 = _same_pad(K2)
    _, pad_r3 = _same_pad(K3)

    B = batch_block if batch_block is not None else _pick_batch_block(N)
    num_blocks = -(-N // B)
    N_pad = num_blocks * B
    Lp = ((L + 15) // 16) * 16              # bf16 sublane-tile aligned length

    # Block-1 im2col built on the host from the (tiny) raw input; this is the
    # only HBM-side padding/copy -- large activations never leave VMEM.
    x = jnp.transpose(x_ncl, (0, 2, 1)).astype(jnp.float32)            # (N, L, C_in)
    x = jnp.pad(x, ((0, N_pad - N), (pad_l1, pad_r1 + (Lp - L)), (0, 0)))
    x_im2col = jnp.concatenate([x[:, k:k + Lp, :] for k in range(K1)], axis=-1)
    x_flat = x_im2col.reshape(N_pad * Lp, K1 * C_in).astype(jnp.bfloat16)

    (w1, s1), (w2, s2), (w3, s3) = [_fold_bn_into_weight(b) for b in blocks]

    num_classes = params["fc_w"].shape[0]
    nc_pad = ((num_classes + 127) // 128) * 128            # lane-dense output
    # 1/L of the global-average pool is folded into the FC weight.
    fc_w = jnp.zeros((c3, nc_pad), jnp.float32)
    fc_w = fc_w.at[:, :num_classes].set(params["fc_w"].astype(jnp.float32).T / L)
    fc_b = jnp.zeros((1, nc_pad), jnp.float32)
    fc_b = fc_b.at[0, :num_classes].set(params["fc_b"].astype(jnp.float32))

    flops = (2 * N_pad * Lp * (K1 * C_in * c1 + K2 * c1 * c2 + K3 * c2 * c3)
             + 2 * N_pad * c3 * nc_pad)
    bytes_accessed = (x_flat.size * 2 + (w1.size + w2.size + w3.size) * 2
                      + (s1.size + s2.size + s3.size + fc_w.size + fc_b.size) * 4
                      + N_pad * nc_pad * 4)
    cost = pl.CostEstimate(flops=int(flops), transcendentals=0,
                           bytes_accessed=int(bytes_accessed))

    kernel = _build_kernel(B, L, Lp, K2, K3)

    out = pl.pallas_call(
        kernel,
        out_shape=jax.ShapeDtypeStruct((num_blocks, B, nc_pad), jnp.float32),
        grid=(num_blocks,),
        in_specs=[
            pl.BlockSpec((B * Lp, K1 * C_in), lambda n: (n, 0)),
            pl.BlockSpec(w1.shape, lambda n: (0, 0)),
            pl.BlockSpec(s1.shape, lambda n: (0, 0)),
            pl.BlockSpec(w2.shape, lambda n: (0, 0)),
            pl.BlockSpec(s2.shape, lambda n: (0, 0)),
            pl.BlockSpec(w3.shape, lambda n: (0, 0)),
            pl.BlockSpec(s3.shape, lambda n: (0, 0)),
            pl.BlockSpec(fc_w.shape, lambda n: (0, 0)),
            pl.BlockSpec(fc_b.shape, lambda n: (0, 0)),
        ],
        out_specs=pl.BlockSpec((1, B, nc_pad), lambda n: (n, 0, 0)),
        scratch_shapes=[
            pltpu.VMEM((B, _HALO + Lp + pad_r2, c1), jnp.bfloat16),
            pltpu.VMEM((B, _HALO + Lp + pad_r3, c2), jnp.bfloat16),
        ],
        compiler_params=pltpu.CompilerParams(
            dimension_semantics=("parallel",),   # batch blocks across both TCs
            vmem_limit_bytes=32 * 1024 * 1024),  # v7x-safe; tiny usage at these sizes
        cost_estimate=cost,
    )(x_flat, w1, s1, w2, s2, w3, s3, fc_w, fc_b)

    out = out.reshape(N_pad, nc_pad)
    return out[:N, :num_classes]


# ------------------------- deterministic parameters ------------------------- #

def init_params(key, in_channels, num_classes):
    specs = [(in_channels, 128, 8), (128, 256, 5), (256, 128, 3)]
    params = {"blocks": []}
    for (ci, co, k) in specs:
        key, k1, k2, k3, k4 = jax.random.split(key, 5)
        bound = 1.0 / math.sqrt(ci * k)
        params["blocks"].append(dict(
            w=jax.random.uniform(k1, (co, ci, k), jnp.float32, -bound, bound),
            b=jax.random.uniform(k2, (co,), jnp.float32, -bound, bound),
            gamma=jax.random.uniform(k3, (co,), jnp.float32, 0.5, 1.5),
            beta=jax.random.uniform(k4, (co,), jnp.float32, -0.5, 0.5),
            mean=jnp.zeros((co,), jnp.float32),
            var=jnp.ones((co,), jnp.float32),
        ))
    key, k1, k2 = jax.random.split(key, 3)
    bound = 1.0 / math.sqrt(128)
    params["fc_w"] = jax.random.uniform(k1, (num_classes, 128), jnp.float32, -bound, bound)
    params["fc_b"] = jax.random.uniform(k2, (num_classes,), jnp.float32, -bound, bound)
    return params


# ------------------------------ pure-JAX reference -------------------------- #

def ref_forward(params, x_ncl):
    x = x_ncl.astype(jnp.float32)
    for blk in params["blocks"]:
        K = blk["w"].shape[2]
        pad = K - 1
        left, right = pad // 2, pad - pad // 2
        y = lax.conv_general_dilated(
            x, blk["w"], window_strides=(1,), padding=[(left, right)],
            dimension_numbers=("NCH", "OIH", "NCH"))
        y = y + blk["b"][None, :, None]
        inv = 1.0 / jnp.sqrt(blk["var"] + 1e-5)
        y = ((y - blk["mean"][None, :, None]) * inv[None, :, None]
             * blk["gamma"][None, :, None] + blk["beta"][None, :, None])
        x = jnp.maximum(y, 0.0)
    return x.mean(axis=-1) @ params["fc_w"].T + params["fc_b"]


# ----------------------------------- main ----------------------------------- #

if __name__ == "__main__":
    key = jax.random.PRNGKey(0)

    # Small primary test (B=1 path, 2 grid steps) and a batched test that
    # exercises the B=8-per-step / M=B*L path the review asked for.
    for (N, C_IN, L, NUM_CLASSES) in [(2, 4, 16, 3), (16, 4, 16, 3)]:
        key, xk, pk = jax.random.split(key, 3)
        x = jax.random.normal(xk, (N, C_IN, L), jnp.float32)
        params = init_params(pk, C_IN, NUM_CLASSES)

        out = jax.block_until_ready(fcn_forward(params, x))
        ref = jax.block_until_ready(ref_forward(params, x))

        assert out.shape == (N, NUM_CLASSES), out.shape
        # bf16 MXU inputs (f32 accumulation) vs. pure-f32 reference -> loose tol.
        assert jnp.allclose(out, ref, rtol=5e-2, atol=5e-2), (out, ref)

    print("KERNEL_OK")
</pallas_src>

<mosaic_0001>
module attributes {stable_mosaic.version = 11 : i64} {
  func.func @kernel(%arg0: i32, %arg1: memref<16x32xbf16, #tpu.memory_space<vmem>>, %arg2: memref<32x128xbf16, #tpu.memory_space<vmem>>, %arg3: memref<1x128xf32, #tpu.memory_space<vmem>>, %arg4: memref<640x256xbf16, #tpu.memory_space<vmem>>, %arg5: memref<1x256xf32, #tpu.memory_space<vmem>>, %arg6: memref<768x128xbf16, #tpu.memory_space<vmem>>, %arg7: memref<1x128xf32, #tpu.memory_space<vmem>>, %arg8: memref<128x128xf32, #tpu.memory_space<vmem>>, %arg9: memref<1x128xf32, #tpu.memory_space<vmem>>, %arg10: memref<1x1x128xf32, #tpu.memory_space<vmem>>, %arg11: memref<1x34x128xbf16, #tpu.memory_space<vmem>>, %arg12: memref<1x33x256xbf16, #tpu.memory_space<vmem>>) attributes {dimension_semantics = [#tpu.dimension_semantics<parallel>], iteration_bounds = array<i64: 2>, scalar_prefetch = 0 : i64, scratch_operands = 2 : i64, tpu.core_type = #tpu.core_type<tc>, window_params = [{transform_indices = @transform_0, window_bounds = array<i64: 16, 32>}, {pipeline_mode = #tpu.pipeline_mode<synchronous>, transform_indices = @transform_1, window_bounds = array<i64: 32, 128>}, {pipeline_mode = #tpu.pipeline_mode<synchronous>, transform_indices = @transform_2, window_bounds = array<i64: 1, 128>}, {pipeline_mode = #tpu.pipeline_mode<synchronous>, transform_indices = @transform_3, window_bounds = array<i64: 640, 256>}, {pipeline_mode = #tpu.pipeline_mode<synchronous>, transform_indices = @transform_4, window_bounds = array<i64: 1, 256>}, {pipeline_mode = #tpu.pipeline_mode<synchronous>, transform_indices = @transform_5, window_bounds = array<i64: 768, 128>}, {pipeline_mode = #tpu.pipeline_mode<synchronous>, transform_indices = @transform_6, window_bounds = array<i64: 1, 128>}, {pipeline_mode = #tpu.pipeline_mode<synchronous>, transform_indices = @transform_7, window_bounds = array<i64: 128, 128>}, {pipeline_mode = #tpu.pipeline_mode<synchronous>, transform_indices = @transform_8, window_bounds = array<i64: 1, 128>}, {transform_indices = @transform_9, window_bounds = array<i64: 1, 1, 128>}]} {
    %c0 = arith.constant 0 : index
    %c0_0 = arith.constant 0 : index
    %0 = vector.load %arg1[%c0, %c0_0] : memref<16x32xbf16, #tpu.memory_space<vmem>>, vector<16x32xbf16>
    %c0_1 = arith.constant 0 : index
    %c0_2 = arith.constant 0 : index
    %1 = vector.load %arg2[%c0_1, %c0_2] : memref<32x128xbf16, #tpu.memory_space<vmem>>, vector<32x128xbf16>
    %cst = arith.constant dense<0.000000e+00> : vector<16x128xf32>
    %2 = tpu.matmul %0, %1, %cst {dimension_numbers = #tpu.dot_dimension_numbers<[1], [0], [0], [1], [0, 0, 1, 1], [], []>} : vector<16x32xbf16>, vector<32x128xbf16>, vector<16x128xf32> -> vector<16x128xf32>
    %c0_3 = arith.constant 0 : index
    %c0_4 = arith.constant 0 : index
    %3 = vector.load %arg3[%c0_3, %c0_4] : memref<1x128xf32, #tpu.memory_space<vmem>>, vector<1x128xf32>
    %4 = vector.broadcast %3 : vector<1x128xf32> to vector<16x128xf32>
    %5 = arith.addf %2, %4 : vector<16x128xf32>
    %cst_5 = arith.constant 0.000000e+00 : f32
    %6 = vector.broadcast %cst_5 : f32 to vector<16x128xf32>
    %7 = arith.maximumf %5, %6 : vector<16x128xf32>
    %8 = arith.truncf %7 : vector<16x128xf32> to vector<16x128xbf16>
    %9 = vector.shape_cast %8 : vector<16x128xbf16> to vector<1x16x128xbf16>
    %c0_6 = arith.constant 0 : index
    %c16 = arith.constant 16 : index
    %c0_7 = arith.constant 0 : index
    %10 = vector.load %arg11[%c0_6, %c16, %c0_7] : memref<1x34x128xbf16, #tpu.memory_space<vmem>>, vector<1x16x128xbf16>
    tpu.vector_store %arg11[%c0_6, %c16, %c0_7], %9 {strides = array<i32>} : memref<1x34x128xbf16, #tpu.memory_space<vmem>>, vector<1x16x128xbf16>,
    %cst_8 = arith.constant 0.000000e+00 : bf16
    %11 = vector.broadcast %cst_8 : bf16 to vector<1x2x128xbf16>
    %c0_9 = arith.constant 0 : index
    %c14 = arith.constant 14 : index
    %c0_10 = arith.constant 0 : index
    %12 = vector.load %arg11[%c0_9, %c14, %c0_10] : memref<1x34x128xbf16, #tpu.memory_space<vmem>>, vector<1x2x128xbf16>
    tpu.vector_store %arg11[%c0_9, %c14, %c0_10], %11 {strides = array<i32>} : memref<1x34x128xbf16, #tpu.memory_space<vmem>>, vector<1x2x128xbf16>,
    %cst_11 = arith.constant 0.000000e+00 : bf16
    %13 = vector.broadcast %cst_11 : bf16 to vector<1x2x128xbf16>
    %c0_12 = arith.constant 0 : index
    %c32 = arith.constant 32 : index
    %c0_13 = arith.constant 0 : index
    %14 = vector.load %arg11[%c0_12, %c32, %c0_13] : memref<1x34x128xbf16, #tpu.memory_space<vmem>>, vector<1x2x128xbf16>
    tpu.vector_store %arg11[%c0_12, %c32, %c0_13], %13 {strides = array<i32>} : memref<1x34x128xbf16, #tpu.memory_space<vmem>>, vector<1x2x128xbf16>,
    %c0_14 = arith.constant 0 : index
    %c14_15 = arith.constant 14 : index
    %c0_16 = arith.constant 0 : index
    %15 = vector.load %arg11[%c0_14, %c14_15, %c0_16] : memref<1x34x128xbf16, #tpu.memory_space<vmem>>, vector<1x16x128xbf16>
    %16 = vector.shape_cast %15 : vector<1x16x128xbf16> to vector<16x128xbf16>
    %c0_17 = arith.constant 0 : index
    %c0_18 = arith.constant 0 : index
    %17 = vector.load %arg4[%c0_17, %c0_18] : memref<640x256xbf16, #tpu.memory_space<vmem>>, vector<128x256xbf16>
    %cst_19 = arith.constant dense<0.000000e+00> : vector<16x256xf32>
    %18 = tpu.matmul %16, %17, %cst_19 {dimension_numbers = #tpu.dot_dimension_numbers<[1], [0], [0], [1], [0, 0, 1, 1], [], []>} : vector<16x128xbf16>, vector<128x256xbf16>, vector<16x256xf32> -> vector<16x256xf32>
    %c0_20 = arith.constant 0 : index
    %c15 = arith.constant 15 : index
    %c0_21 = arith.constant 0 : index
    %19 = vector.load %arg11[%c0_20, %c15, %c0_21] : memref<1x34x128xbf16, #tpu.memory_space<vmem>>, vector<1x16x128xbf16>
    %20 = vector.shape_cast %19 : vector<1x16x128xbf16> to vector<16x128xbf16>
    %c128 = arith.constant 128 : index
    %c0_22 = arith.constant 0 : index
    %21 = vector.load %arg4[%c128, %c0_22] : memref<640x256xbf16, #tpu.memory_space<vmem>>, vector<128x256xbf16>
    %cst_23 = arith.constant dense<0.000000e+00> : vector<16x256xf32>
    %22 = tpu.matmul %20, %21, %cst_23 {dimension_numbers = #tpu.dot_dimension_numbers<[1], [0], [0], [1], [0, 0, 1, 1], [], []>} : vector<16x128xbf16>, vector<128x256xbf16>, vector<16x256xf32> -> vector<16x256xf32>
    %23 = arith.addf %18, %22 : vector<16x256xf32>
    %c0_24 = arith.constant 0 : index
    %c16_25 = arith.constant 16 : index
    %c0_26 = arith.constant 0 : index
    %24 = vector.load %arg11[%c0_24, %c16_25, %c0_26] : memref<1x34x128xbf16, #tpu.memory_space<vmem>>, vector<1x16x128xbf16>
    %25 = vector.shape_cast %24 : vector<1x16x128xbf16> to vector<16x128xbf16>
    %c256 = arith.constant 256 : index
    %c0_27 = arith.constant 0 : index
    %26 = vector.load %arg4[%c256, %c0_27] : memref<640x256xbf16, #tpu.memory_space<vmem>>, vector<128x256xbf16>
    %cst_28 = arith.constant dense<0.000000e+00> : vector<16x256xf32>
    %27 = tpu.matmul %25, %26, %cst_28 {dimension_numbers = #tpu.dot_dimension_numbers<[1], [0], [0], [1], [0, 0, 1, 1], [], []>} : vector<16x128xbf16>, vector<128x256xbf16>, vector<16x256xf32> -> vector<16x256xf32>
    %28 = arith.addf %23, %27 : vector<16x256xf32>
    %c0_29 = arith.constant 0 : index
    %c17 = arith.constant 17 : index
    %c0_30 = arith.constant 0 : index
    %29 = vector.load %arg11[%c0_29, %c17, %c0_30] : memref<1x34x128xbf16, #tpu.memory_space<vmem>>, vector<1x16x128xbf16>
    %30 = vector.shape_cast %29 : vector<1x16x128xbf16> to vector<16x128xbf16>
    %c384 = arith.constant 384 : index
    %c0_31 = arith.constant 0 : index
    %31 = vector.load %arg4[%c384, %c0_31] : memref<640x256xbf16, #tpu.memory_space<vmem>>, vector<128x256xbf16>
    %cst_32 = arith.constant dense<0.000000e+00> : vector<16x256xf32>
    %32 = tpu.matmul %30, %31, %cst_32 {dimension_numbers = #tpu.dot_dimension_numbers<[1], [0], [0], [1], [0, 0, 1, 1], [], []>} : vector<16x128xbf16>, vector<128x256xbf16>, vector<16x256xf32> -> vector<16x256xf32>
    %33 = arith.addf %28, %32 : vector<16x256xf32>
    %c0_33 = arith.constant 0 : index
    %c18 = arith.constant 18 : index
    %c0_34 = arith.constant 0 : index
    %34 = vector.load %arg11[%c0_33, %c18, %c0_34] : memref<1x34x128xbf16, #tpu.memory_space<vmem>>, vector<1x16x128xbf16>
    %35 = vector.shape_cast %34 : vector<1x16x128xbf16> to vector<16x128xbf16>
    %c512 = arith.constant 512 : index
    %c0_35 = arith.constant 0 : index
    %36 = vector.load %arg4[%c512, %c0_35] : memref<640x256xbf16, #tpu.memory_space<vmem>>, vector<128x256xbf16>
    %cst_36 = arith.constant dense<0.000000e+00> : vector<16x256xf32>
    %37 = tpu.matmul %35, %36, %cst_36 {dimension_numbers = #tpu.dot_dimension_numbers<[1], [0], [0], [1], [0, 0, 1, 1], [], []>} : vector<16x128xbf16>, vector<128x256xbf16>, vector<16x256xf32> -> vector<16x256xf32>
    %38 = arith.addf %33, %37 : vector<16x256xf32>
    %c0_37 = arith.constant 0 : index
    %c0_38 = arith.constant 0 : index
    %39 = vector.load %arg5[%c0_37, %c0_38] : memref<1x256xf32, #tpu.memory_space<vmem>>, vector<1x256xf32>
    %40 = vector.broadcast %39 : vector<1x256xf32> to vector<16x256xf32>
    %41 = arith.addf %38, %40 : vector<16x256xf32>
    %cst_39 = arith.constant 0.000000e+00 : f32
    %42 = vector.broadcast %cst_39 : f32 to vector<16x256xf32>
    %43 = arith.maximumf %41, %42 : vector<16x256xf32>
    %44 = arith.truncf %43 : vector<16x256xf32> to vector<16x256xbf16>
    %45 = vector.shape_cast %44 : vector<16x256xbf16> to vector<1x16x256xbf16>
    %c0_40 = arith.constant 0 : index
    %c16_41 = arith.constant 16 : index
    %c0_42 = arith.constant 0 : index
    %46 = vector.load %arg12[%c0_40, %c16_41, %c0_42] : memref<1x33x256xbf16, #tpu.memory_space<vmem>>, vector<1x16x256xbf16>
    tpu.vector_store %arg12[%c0_40, %c16_41, %c0_42], %45 {strides = array<i32>} : memref<1x33x256xbf16, #tpu.memory_space<vmem>>, vector<1x16x256xbf16>,
    %cst_43 = arith.constant 0.000000e+00 : bf16
    %47 = vector.broadcast %cst_43 : bf16 to vector<1x1x256xbf16>
    %c0_44 = arith.constant 0 : index
    %c15_45 = arith.constant 15 : index
    %c0_46 = arith.constant 0 : index
    %48 = vector.load %arg12[%c0_44, %c15_45, %c0_46] : memref<1x33x256xbf16, #tpu.memory_space<vmem>>, vector<1x1x256xbf16>
    tpu.vector_store %arg12[%c0_44, %c15_45, %c0_46], %47 {strides = array<i32>} : memref<1x33x256xbf16, #tpu.memory_space<vmem>>, vector<1x1x256xbf16>,
    %cst_47 = arith.constant 0.000000e+00 : bf16
    %49 = vector.broadcast %cst_47 : bf16 to vector<1x1x256xbf16>
    %c0_48 = arith.constant 0 : index
    %c32_49 = arith.constant 32 : index
    %c0_50 = arith.constant 0 : index
    %50 = vector.load %arg12[%c0_48, %c32_49, %c0_50] : memref<1x33x256xbf16, #tpu.memory_space<vmem>>, vector<1x1x256xbf16>
    tpu.vector_store %arg12[%c0_48, %c32_49, %c0_50], %49 {strides = array<i32>} : memref<1x33x256xbf16, #tpu.memory_space<vmem>>, vector<1x1x256xbf16>,
    %c0_51 = arith.constant 0 : index
    %c15_52 = arith.constant 15 : index
    %c0_53 = arith.constant 0 : index
    %51 = vector.load %arg12[%c0_51, %c15_52, %c0_53] : memref<1x33x256xbf16, #tpu.memory_space<vmem>>, vector<1x16x256xbf16>
    %52 = vector.shape_cast %51 : vector<1x16x256xbf16> to vector<16x256xbf16>
    %c0_54 = arith.constant 0 : index
    %c0_55 = arith.constant 0 : index
    %53 = vector.load %arg6[%c0_54, %c0_55] : memref<768x128xbf16, #tpu.memory_space<vmem>>, vector<256x128xbf16>
    %cst_56 = arith.constant dense<0.000000e+00> : vector<16x128xf32>
    %54 = tpu.matmul %52, %53, %cst_56 {dimension_numbers = #tpu.dot_dimension_numbers<[1], [0], [0], [1], [0, 0, 1, 1], [], []>} : vector<16x256xbf16>, vector<256x128xbf16>, vector<16x128xf32> -> vector<16x128xf32>
    %c0_57 = arith.constant 0 : index
    %c16_58 = arith.constant 16 : index
    %c0_59 = arith.constant 0 : index
    %55 = vector.load %arg12[%c0_57, %c16_58, %c0_59] : memref<1x33x256xbf16, #tpu.memory_space<vmem>>, vector<1x16x256xbf16>
    %56 = vector.shape_cast %55 : vector<1x16x256xbf16> to vector<16x256xbf16>
    %c256_60 = arith.constant 256 : index
    %c0_61 = arith.constant 0 : index
    %57 = vector.load %arg6[%c256_60, %c0_61] : memref<768x128xbf16, #tpu.memory_space<vmem>>, vector<256x128xbf16>
    %cst_62 = arith.constant dense<0.000000e+00> : vector<16x128xf32>
    %58 = tpu.matmul %56, %57, %cst_62 {dimension_numbers = #tpu.dot_dimension_numbers<[1], [0], [0], [1], [0, 0, 1, 1], [], []>} : vector<16x256xbf16>, vector<256x128xbf16>, vector<16x128xf32> -> vector<16x128xf32>
    %59 = arith.addf %54, %58 : vector<16x128xf32>
    %c0_63 = arith.constant 0 : index
    %c17_64 = arith.constant 17 : index
    %c0_65 = arith.constant 0 : index
    %60 = vector.load %arg12[%c0_63, %c17_64, %c0_65] : memref<1x33x256xbf16, #tpu.memory_space<vmem>>, vector<1x16x256xbf16>
    %61 = vector.shape_cast %60 : vector<1x16x256xbf16> to vector<16x256xbf16>
    %c512_66 = arith.constant 512 : index
    %c0_67 = arith.constant 0 : index
    %62 = vector.load %arg6[%c512_66, %c0_67] : memref<768x128xbf16, #tpu.memory_space<vmem>>, vector<256x128xbf16>
    %cst_68 = arith.constant dense<0.000000e+00> : vector<16x128xf32>
    %63 = tpu.matmul %61, %62, %cst_68 {dimension_numbers = #tpu.dot_dimension_numbers<[1], [0], [0], [1], [0, 0, 1, 1], [], []>} : vector<16x256xbf16>, vector<256x128xbf16>, vector<16x128xf32> -> vector<16x128xf32>
    %64 = arith.addf %59, %63 : vector<16x128xf32>
    %c0_69 = arith.constant 0 : index
    %c0_70 = arith.constant 0 : index
    %65 = vector.load %arg7[%c0_69, %c0_70] : memref<1x128xf32, #tpu.memory_space<vmem>>, vector<1x128xf32>
    %66 = vector.broadcast %65 : vector<1x128xf32> to vector<16x128xf32>
    %67 = arith.addf %64, %66 : vector<16x128xf32>
    %cst_71 = arith.constant 0.000000e+00 : f32
    %68 = vector.broadcast %cst_71 : f32 to vector<16x128xf32>
    %69 = arith.maximumf %67, %68 : vector<16x128xf32>
    %70 = vector.shape_cast %69 : vector<16x128xf32> to vector<1x16x128xf32>
    %cst_72 = arith.constant dense<0.000000e+00> : vector<1x128xf32>
    %71 = vector.multi_reduction <add>, %70, %cst_72 [1] : vector<1x16x128xf32> to vector<1x128xf32>
    %c0_73 = arith.constant 0 : index
    %c0_74 = arith.constant 0 : index
    %72 = vector.load %arg8[%c0_73, %c0_74] : memref<128x128xf32, #tpu.memory_space<vmem>>, vector<128x128xf32>
    %cst_75 = arith.constant dense<0.000000e+00> : vector<1x128xf32>
    %73 = tpu.matmul %71, %72, %cst_75 {dimension_numbers = #tpu.dot_dimension_numbers<[1], [0], [0], [1], [0, 0, 1, 1], [], []>} : vector<1x128xf32>, vector<128x128xf32>, vector<1x128xf32> -> vector<1x128xf32>
    %c0_76 = arith.constant 0 : index
    %c0_77 = arith.constant 0 : index
    %74 = vector.load %arg9[%c0_76, %c0_77] : memref<1x128xf32, #tpu.memory_space<vmem>>, vector<1x128xf32>
    %75 = arith.addf %73, %74 : vector<1x128xf32>
    %c0_78 = arith.constant 0 : index
    %c0_79 = arith.constant 0 : index
    %c0_80 = arith.constant 0 : index
    %76 = vector.load %arg10[%c0_78, %c0_79, %c0_80] : memref<1x1x128xf32, #tpu.memory_space<vmem>>, vector<1x1x128xf32>
    %77 = vector.shape_cast %76 : vector<1x1x128xf32> to vector<1x128xf32>
    %78 = vector.shape_cast %75 : vector<1x128xf32> to vector<1x1x128xf32>
    tpu.vector_store %arg10[%c0_78, %c0_79, %c0_80], %78 {strides = array<i32>} : memref<1x1x128xf32, #tpu.memory_space<vmem>>, vector<1x1x128xf32>,
    return
  }
  func.func @transform_0(%arg0: i32) -> (i32, i32) {
    %c0_i32 = arith.constant 0 : i32
    %c0_i32_0 = arith.constant 0 : i32
    return %arg0, %c0_i32 : i32, i32
  }
  func.func @transform_1(%arg0: i32) -> (i32, i32) {
    %c0_i32 = arith.constant 0 : i32
    %c0_i32_0 = arith.constant 0 : i32
    %c0_i32_1 = arith.constant 0 : i32
    return %c0_i32, %c0_i32_0 : i32, i32
  }
  func.func @transform_2(%arg0: i32) -> (i32, i32) {
    %c0_i32 = arith.constant 0 : i32
    %c0_i32_0 = arith.constant 0 : i32
    %c0_i32_1 = arith.constant 0 : i32
    return %c0_i32, %c0_i32_0 : i32, i32
  }
  func.func @transform_3(%arg0: i32) -> (i32, i32) {
    %c0_i32 = arith.constant 0 : i32
    %c0_i32_0 = arith.constant 0 : i32
    %c0_i32_1 = arith.constant 0 : i32
    return %c0_i32, %c0_i32_0 : i32, i32
  }
  func.func @transform_4(%arg0: i32) -> (i32, i32) {
    %c0_i32 = arith.constant 0 : i32
    %c0_i32_0 = arith.constant 0 : i32
    %c0_i32_1 = arith.constant 0 : i32
    return %c0_i32, %c0_i32_0 : i32, i32
  }
  func.func @transform_5(%arg0: i32) -> (i32, i32) {
    %c0_i32 = arith.constant 0 : i32
    %c0_i32_0 = arith.constant 0 : i32
    %c0_i32_1 = arith.constant 0 : i32
    return %c0_i32, %c0_i32_0 : i32, i32
  }
  func.func @transform_6(%arg0: i32) -> (i32, i32) {
    %c0_i32 = arith.constant 0 : i32
    %c0_i32_0 = arith.constant 0 : i32
    %c0_i32_1 = arith.constant 0 : i32
    return %c0_i32, %c0_i32_0 : i32, i32
  }
  func.func @transform_7(%arg0: i32) -> (i32, i32) {
    %c0_i32 = arith.constant 0 : i32
    %c0_i32_0 = arith.constant 0 : i32
    %c0_i32_1 = arith.constant 0 : i32
    return %c0_i32, %c0_i32_0 : i32, i32
  }
  func.func @transform_8(%arg0: i32) -> (i32, i32) {
    %c0_i32 = arith.constant 0 : i32
    %c0_i32_0 = arith.constant 0 : i32
    %c0_i32_1 = arith.constant 0 : i32
    return %c0_i32, %c0_i32_0 : i32, i32
  }
  func.func @transform_9(%arg0: i32) -> (i32, i32, i32) {
    %c0_i32 = arith.constant 0 : i32
    %c0_i32_0 = arith.constant 0 : i32
    %c0_i32_1 = arith.constant 0 : i32
    return %arg0, %c0_i32, %c0_i32_0 : i32, i32, i32
  }
}

</mosaic_0001>

<llo_original>
// kernel: tpu_custom_call.1
$region0: #{tpu_custom_call.1}
  #allocation0 [shape = 'u32[]', space=smem, size = 0x4, offset = 0x4, fixed_abs, tag = 'smem constant byte address 0x4 - core index']
  #allocation1 [shape = 'u32[144,128]{1,0:T(1,128)}', space=vmem, size = 0x12000, scoped, tag = 'internal scratch']
  #allocation2 [shape = 'bf16[1,34,128]{2,1,0:T(8,128)(2,1)}', space=vmem, size = 0x2800, scoped, tag = 'scratch operand']
  #allocation3 [shape = 'bf16[1,33,256]{2,1,0:T(8,128)(2,1)}', space=vmem, size = 0x5000, scoped, tag = 'scratch operand']
  %s0 = inlined_call_operand.hbm [shape: bf16[32,32], index: 0, kind: input, shape index: {}]
  %s1 = inlined_call_operand.hbm [shape: bf16[32,128], index: 1, kind: input, shape index: {}]
  %s2 = inlined_call_operand.vmem [shape: f32[1,128], index: 2, kind: input, shape index: {}]
  %s3 = inlined_call_operand.hbm [shape: bf16[640,256], index: 3, kind: input, shape index: {}]
  %s4 = inlined_call_operand.vmem [shape: f32[1,256], index: 4, kind: input, shape index: {}]
  %s5 = inlined_call_operand.hbm [shape: bf16[768,128], index: 5, kind: input, shape index: {}]
  %s6 = inlined_call_operand.vmem [shape: f32[1,128], index: 6, kind: input, shape index: {}]
  %s7 = inlined_call_operand.hbm [shape: f32[128,128], index: 7, kind: input, shape index: {}]
  %s8 = inlined_call_operand.vmem [shape: f32[1,128], index: 8, kind: input, shape index: {}]
  %s9 = inlined_call_operand.hbm [shape: f32[2,1,128], index: 9, kind: output, shape index: {}]
  %s10 = sld [smem:[#allocation0]]
  $region89: #{tpu_custom_call.1} parent=0
    _
  %s12 = ssub.s32 1, %s10
  %s13 = scalar_select 0, %s12, %s10
  $region1: #{tpu_custom_call.1} parent=0
    #allocation4 [shape = 'u8[8192]{0}', space=vmem, size = 0x2000, scoped, tag = 'input window, operand 0']
    #allocation5 [shape = 's32[2]{0}', space=sflag, size = 0x8, scoped, tag = 'scoped memory for tpu_custom_call.1']
    #allocation6 [shape = 's32[2]{0}', space=sflag, size = 0x8, scoped, tag = 'scoped memory for tpu_custom_call.1']
    #allocation7 [shape = 'u8[8192]{0}', space=vmem, size = 0x2000, scoped, tag = 'input window, operand 1, single buffered']
    #allocation8 [shape = 's32[1]{0}', space=sflag, size = 0x4, scoped, tag = 'scoped memory for tpu_custom_call.1']
    #allocation9 [shape = 'u8[327680]{0}', space=vmem, size = 0x50000, scoped, tag = 'input window, operand 3, single buffered']
    #allocation10 [shape = 'u8[196608]{0}', space=vmem, size = 0x30000, scoped, tag = 'input window, operand 5, single buffered']
    #allocation11 [shape = 's32[1]{0}', space=sflag, size = 0x4, scoped, tag = 'scoped memory for tpu_custom_call.1']
    #allocation12 [shape = 'u8[65536]{0}', space=vmem, size = 0x10000, scoped, tag = 'input window, operand 7, single buffered']
    #allocation13 [shape = 'u8[1024]{0}', space=vmem, size = 0x400, scoped, tag = 'output window, operand 0']
    %14 = vsyncpa [#allocation5], 0
    %s15 = scalar_lea.sflag [#allocation5], 1
    %16 = vsyncpa %s15, 0
    %17 = vsyncpa [#allocation8], 0
    %18 = vsyncpa [#allocation11], 0
    %19 = vsyncpa [#allocation6], 0
    %s20 = scalar_lea.sflag [#allocation6], 1
    %21 = vsyncpa %s20, 0
    loop: start=0, step=1, limit=4
    $region2: #{tpu_custom_call.1} parent=1 // loop_pre_header
      _
    $region3: #{tpu_custom_call.1} parent=1 // loop_header
      %s23 = sphi 0, %s27
      %p24 = scmp.ge.s32.totalorder %s23, 4
      %s33 = sphi 0, %s35
      %s36 = sphi 0, %s33
      %s37 = sphi 0, %s36
      %s53 = sphi 0, %s37
      %s57 = sphi 0, %s57
      %s59 = sphi 0, %s57
      %s60 = sphi 0, %s59
      %s74 = sphi 0, %s60
      %s78 = sphi 0, %s78
      %s80 = sphi 0, %s78
      %s81 = sphi 0, %s80
      %s95 = sphi 0, %s81
      %s99 = sphi 0, %s99
      %s101 = sphi 0, %s99
      %s102 = sphi 0, %s101
      %s116 = sphi 0, %s102
      %s120 = sphi 0, %s120
      %s122 = sphi 0, %s120
      %s123 = sphi 0, %s122
      %s137 = sphi 0, %s123
      %s141 = sphi 0, %s141
      %s143 = sphi 0, %s141
      %s144 = sphi 0, %s143
      %s158 = sphi 0, %s144
      %s162 = sphi 0, %s162
      %s164 = sphi 0, %s162
      %s165 = sphi 0, %s164
      %s179 = sphi 0, %s165
      %s183 = sphi 0, %s183
      %s185 = sphi 0, %s183
      %s186 = sphi 0, %s185
      %s200 = sphi 0, %s186
      %s204 = sphi 0, %s204
      %s206 = sphi 0, %s204
      %s207 = sphi 0, %s206
      %s221 = sphi 0, %s207
      %s227 = sphi 0, %s229
      %s230 = sphi 0, %s227
      %s231 = sphi 0, %s230
      %s247 = sphi 0, %s231
    $region4: #{tpu_custom_call.1} parent=1 // loop_header_branch
      %26 = sbr.rel (%p24) target = $region8
    $region5: #{tpu_custom_call.1} parent=1 // loop_body
      %s28 = ssub.s32 %s23, 1
      %s29 = ssub.s32 %s23, 2
      %s30 = sadd.s32 %s23, 1
      %s31 = ssub.s32 %s23, %s30
      %p32 = scmp.eq.s32.totalorder %s31, 0
      %s34 = sadd.s32 %s33, 1
      %s35 = scalar_select %p32, %s33, %s34
      %p38 = pneg %p32
      %p39 = scmp.eq.s32.totalorder %s23, 1
      %p40 = por %p38, %p39
      %p41 = scmp.ne.s32.totalorder %s33, %s36
      %p42 = scmp.eq.s32.totalorder %s23, 0
      %p43 = por %p41, %p42
      %p44 = scmp.ne.s32.totalorder %s33, %s36
      %p45 = scmp.eq.s32.totalorder %s28, 1
      %p46 = por %p44, %p45
      %p47 = scmp.ne.s32.totalorder %s36, %s37
      %p48 = scmp.eq.s32.totalorder %s28, 0
      %p49 = por %p47, %p48
      %p50 = scmp.ne.s32.totalorder %s36, %s37
      %p51 = scmp.eq.s32.totalorder %s29, 1
      %p52 = por %p50, %p51
      %p54 = scmp.ne.s32.totalorder %s37, %s53
      %p55 = scmp.eq.s32.totalorder %s29, 0
      %p56 = por %p54, %p55
      %s58 = sadd.s32 %s57, 1
      %p61 = scmp.eq.s32.totalorder %s23, 1
      %p62 = scmp.ne.s32.totalorder %s57, %s59
      %p63 = scmp.eq.s32.totalorder %s23, 0
      %p64 = por %p62, %p63
      %p65 = scmp.ne.s32.totalorder %s57, %s59
      %p66 = scmp.eq.s32.totalorder %s28, 1
      %p67 = por %p65, %p66
      %p68 = scmp.ne.s32.totalorder %s59, %s60
      %p69 = scmp.eq.s32.totalorder %s28, 0
      %p70 = por %p68, %p69
      %p71 = scmp.ne.s32.totalorder %s59, %s60
      %p72 = scmp.eq.s32.totalorder %s29, 1
      %p73 = por %p71, %p72
      %p75 = scmp.ne.s32.totalorder %s60, %s74
      %p76 = scmp.eq.s32.totalorder %s29, 0
      %p77 = por %p75, %p76
      %s79 = sadd.s32 %s78, 1
      %p82 = scmp.eq.s32.totalorder %s23, 1
      %p83 = scmp.ne.s32.totalorder %s78, %s80
      %p84 = scmp.eq.s32.totalorder %s23, 0
      %p85 = por %p83, %p84
      %p86 = scmp.ne.s32.totalorder %s78, %s80
      %p87 = scmp.eq.s32.totalorder %s28, 1
      %p88 = por %p86, %p87
      %p89 = scmp.ne.s32.totalorder %s80, %s81
      %p90 = scmp.eq.s32.totalorder %s28, 0
      %p91 = por %p89, %p90
      %p92 = scmp.ne.s32.totalorder %s80, %s81
      %p93 = scmp.eq.s32.totalorder %s29, 1
      %p94 = por %p92, %p93
      %p96 = scmp.ne.s32.totalorder %s81, %s95
      %p97 = scmp.eq.s32.totalorder %s29, 0
      %p98 = por %p96, %p97
      %s100 = sadd.s32 %s99, 1
      %p103 = scmp.eq.s32.totalorder %s23, 1
      %p104 = scmp.ne.s32.totalorder %s99, %s101
      %p105 = scmp.eq.s32.totalorder %s23, 0
      %p106 = por %p104, %p105
      %p107 = scmp.ne.s32.totalorder %s99, %s101
      %p108 = scmp.eq.s32.totalorder %s28, 1
      %p109 = por %p107, %p108
      %p110 = scmp.ne.s32.totalorder %s101, %s102
      %p111 = scmp.eq.s32.totalorder %s28, 0
      %p112 = por %p110, %p111
      %p113 = scmp.ne.s32.totalorder %s101, %s102
      %p114 = scmp.eq.s32.totalorder %s29, 1
      %p115 = por %p113, %p114
      %p117 = scmp.ne.s32.totalorder %s102, %s116
      %p118 = scmp.eq.s32.totalorder %s29, 0
      %p119 = por %p117, %p118
      %s121 = sadd.s32 %s120, 1
      %p124 = scmp.eq.s32.totalorder %s23, 1
      %p125 = scmp.ne.s32.totalorder %s120, %s122
      %p126 = scmp.eq.s32.totalorder %s23, 0
      %p127 = por %p125, %p126
      %p128 = scmp.ne.s32.totalorder %s120, %s122
      %p129 = scmp.eq.s32.totalorder %s28, 1
      %p130 = por %p128, %p129
      %p131 = scmp.ne.s32.totalorder %s122, %s123
      %p132 = scmp.eq.s32.totalorder %s28, 0
      %p133 = por %p131, %p132
      %p134 = scmp.ne.s32.totalorder %s122, %s123
      %p135 = scmp.eq.s32.totalorder %s29, 1
      %p136 = por %p134, %p135
      %p138 = scmp.ne.s32.totalorder %s123, %s137
      %p139 = scmp.eq.s32.totalorder %s29, 0
      %p140 = por %p138, %p139
      %s142 = sadd.s32 %s141, 1
      %p145 = scmp.eq.s32.totalorder %s23, 1
      %p146 = scmp.ne.s32.totalorder %s141, %s143
      %p147 = scmp.eq.s32.totalorder %s23, 0
      %p148 = por %p146, %p147
      %p149 = scmp.ne.s32.totalorder %s141, %s143
      %p150 = scmp.eq.s32.totalorder %s28, 1
      %p151 = por %p149, %p150
      %p152 = scmp.ne.s32.totalorder %s143, %s144
      %p153 = scmp.eq.s32.totalorder %s28, 0
      %p154 = por %p152, %p153
      %p155 = scmp.ne.s32.totalorder %s143, %s144
      %p156 = scmp.eq.s32.totalorder %s29, 1
      %p157 = por %p155, %p156
      %p159 = scmp.ne.s32.totalorder %s144, %s158
      %p160 = scmp.eq.s32.totalorder %s29, 0
      %p161 = por %p159, %p160
      %s163 = sadd.s32 %s162, 1
      %p166 = scmp.eq.s32.totalorder %s23, 1
      %p167 = scmp.ne.s32.totalorder %s162, %s164
      %p168 = scmp.eq.s32.totalorder %s23, 0
      %p169 = por %p167, %p168
      %p170 = scmp.ne.s32.totalorder %s162, %s164
      %p171 = scmp.eq.s32.totalorder %s28, 1
      %p172 = por %p170, %p171
      %p173 = scmp.ne.s32.totalorder %s164, %s165
      %p174 = scmp.eq.s32.totalorder %s28, 0
      %p175 = por %p173, %p174
      %p176 = scmp.ne.s32.totalorder %s164, %s165
      %p177 = scmp.eq.s32.totalorder %s29, 1
      %p178 = por %p176, %p177
      %p180 = scmp.ne.s32.totalorder %s165, %s179
      %p181 = scmp.eq.s32.totalorder %s29, 0
      %p182 = por %p180, %p181
      %s184 = sadd.s32 %s183, 1
      %p187 = scmp.eq.s32.totalorder %s23, 1
      %p188 = scmp.ne.s32.totalorder %s183, %s185
      %p189 = scmp.eq.s32.totalorder %s23, 0
      %p190 = por %p188, %p189
      %p191 = scmp.ne.s32.totalorder %s183, %s185
      %p192 = scmp.eq.s32.totalorder %s28, 1
      %p193 = por %p191, %p192
      %p194 = scmp.ne.s32.totalorder %s185, %s186
      %p195 = scmp.eq.s32.totalorder %s28, 0
      %p196 = por %p194, %p195
      %p197 = scmp.ne.s32.totalorder %s185, %s186
      %p198 = scmp.eq.s32.totalorder %s29, 1
      %p199 = por %p197, %p198
      %p201 = scmp.ne.s32.totalorder %s186, %s200
      %p202 = scmp.eq.s32.totalorder %s29, 0
      %p203 = por %p201, %p202
      %s205 = sadd.s32 %s204, 1
      %p208 = scmp.eq.s32.totalorder %s23, 1
      %p209 = scmp.ne.s32.totalorder %s204, %s206
      %p210 = scmp.eq.s32.totalorder %s23, 0
      %p211 = por %p209, %p210
      %p212 = scmp.ne.s32.totalorder %s204, %s206
      %p213 = scmp.eq.s32.totalorder %s28, 1
      %p214 = por %p212, %p213
      %p215 = scmp.ne.s32.totalorder %s206, %s207
      %p216 = scmp.eq.s32.totalorder %s28, 0
      %p217 = por %p215, %p216
      %p218 = scmp.ne.s32.totalorder %s206, %s207
      %p219 = scmp.eq.s32.totalorder %s29, 1
      %p220 = por %p218, %p219
      %p222 = scmp.ne.s32.totalorder %s207, %s221
      %p223 = scmp.eq.s32.totalorder %s29, 0
      %p224 = por %p222, %p223
      %s225 = ssub.s32 %s23, %s30
      %p226 = scmp.eq.s32.totalorder %s225, 0
      %s228 = sadd.s32 %s227, 1
      %s229 = scalar_select %p226, %s227, %s228
      %p232 = pneg %p226
      %p233 = scmp.eq.s32.totalorder %s23, 1
      %p234 = por %p232, %p233
      %p235 = scmp.ne.s32.totalorder %s227, %s230
      %p236 = scmp.eq.s32.totalorder %s23, 0
      %p237 = por %p235, %p236
      %p238 = scmp.ne.s32.totalorder %s227, %s230
      %p239 = scmp.eq.s32.totalorder %s28, 1
      %p240 = por %p238, %p239
      %p241 = scmp.ne.s32.totalorder %s230, %s231
      %p242 = scmp.eq.s32.totalorder %s28, 0
      %p243 = por %p241, %p242
      %p244 = scmp.ne.s32.totalorder %s230, %s231
      %p245 = scmp.eq.s32.totalorder %s29, 1
      %p246 = por %p244, %p245
      %p248 = scmp.ne.s32.totalorder %s231, %s247
      %p249 = scmp.eq.s32.totalorder %s29, 0
      %p250 = por %p248, %p249
      %p251 = scmp.le.s32.totalorder 1, %s23
      %p252 = scmp.lt.s32.totalorder %s23, 3
      %p253 = pnand %p251, %p252
      %p254 = pneg %p253
      // Predicated region
      $region9: #{tpu_custom_call.1} parent=5 // pred_check
        _
      $region10: #{tpu_custom_call.1} parent=5 // pred_check_branch
        %256 = sbr.rel (%p253) target = $region12
      $region11: #{tpu_custom_call.1} parent=5 // pred_region
        %s257 = ssub.s32 %s23, 1
        // Predicated region
        $region13: #{tpu_custom_call.1} parent=11 // pred_check
          %p258 = pneg %p70
        $region14: #{tpu_custom_call.1} parent=11 // pred_check_branch
          %260 = sbr.rel (%p258) target = $region16
        $region15: #{tpu_custom_call.1} parent=11 // pred_region
          %s262 = ssub.s32 256, 256
          %263 = vsyncadd [#allocation8], %s262
          %s264 = sshll.u32 [#allocation7], 4
          %s265 = int_to_ptr.vmem [resolvable:$true] %s264
          %270 = dma.hbm_to_vmem [thread:$0]  %s1, 256, %s265, [#allocation8], 64, 64, 4
        $region16: #{tpu_custom_call.1} parent=11 // pred_fallthru
          _
        // Predicated region
        $region17: #{tpu_custom_call.1} parent=11 // pred_check
          %p271 = pneg %p91
        $region18: #{tpu_custom_call.1} parent=11 // pred_check_branch
          %273 = sbr.rel (%p271) target = $region20
        $region19: #{tpu_custom_call.1} parent=11 // pred_region
          _
        $region20: #{tpu_custom_call.1} parent=11 // pred_fallthru
          _
        // Predicated region
        $region21: #{tpu_custom_call.1} parent=11 // pred_check
          %p274 = pneg %p112
        $region22: #{tpu_custom_call.1} parent=11 // pred_check_branch
          %276 = sbr.rel (%p274) target = $region24
        $region23: #{tpu_custom_call.1} parent=11 // pred_region
          %s278 = ssub.s32 10240, 10240
          %279 = vsyncadd [#allocation8], %s278
          %s280 = sshll.u32 [#allocation9], 4
          %s281 = int_to_ptr.vmem [resolvable:$true] %s280
          %286 = dma.hbm_to_vmem [thread:$0]  %s3, 10240, %s281, [#allocation8], 128, 128, 8
        $region24: #{tpu_custom_call.1} parent=11 // pred_fallthru
          _
        // Predicated region
        $region25: #{tpu_custom_call.1} parent=11 // pred_check
          %p287 = pneg %p133
        $region26: #{tpu_custom_call.1} parent=11 // pred_check_branch
          %289 = sbr.rel (%p287) target = $region28
        $region27: #{tpu_custom_call.1} parent=11 // pred_region
          _
        $region28: #{tpu_custom_call.1} parent=11 // pred_fallthru
          _
        // Predicated region
        $region29: #{tpu_custom_call.1} parent=11 // pred_check
          %p290 = pneg %p154
        $region30: #{tpu_custom_call.1} parent=11 // pred_check_branch
          %292 = sbr.rel (%p290) target = $region32
        $region31: #{tpu_custom_call.1} parent=11 // pred_region
          %s294 = ssub.s32 6144, 6144
          %295 = vsyncadd [#allocation11], %s294
          %s296 = sshll.u32 [#allocation10], 4
          %s297 = int_to_ptr.vmem [resolvable:$true] %s296
          %302 = dma.hbm_to_vmem [thread:$0]  %s5, 6144, %s297, [#allocation11], 64, 64, 4
        $region32: #{tpu_custom_call.1} parent=11 // pred_fallthru
          _
        // Predicated region
        $region33: #{tpu_custom_call.1} parent=11 // pred_check
          %p303 = pneg %p175
        $region34: #{tpu_custom_call.1} parent=11 // pred_check_branch
          %305 = sbr.rel (%p303) target = $region36
        $region35: #{tpu_custom_call.1} parent=11 // pred_region
          _
        $region36: #{tpu_custom_call.1} parent=11 // pred_fallthru
          _
        // Predicated region
        $region37: #{tpu_custom_call.1} parent=11 // pred_check
          %p306 = pneg %p196
        $region38: #{tpu_custom_call.1} parent=11 // pred_check_branch
          %308 = sbr.rel (%p306) target = $region40
        $region39: #{tpu_custom_call.1} parent=11 // pred_region
          %s310 = ssub.s32 2048, 2048
          %311 = vsyncadd [#allocation11], %s310
          %s312 = sshll.u32 [#allocation12], 4
          %s313 = int_to_ptr.vmem [resolvable:$true] %s312
          %318 = dma.hbm_to_vmem [thread:$0]  %s7, 2048, %s313, [#allocation11], 128, 128, 8
        $region40: #{tpu_custom_call.1} parent=11 // pred_fallthru
          _
        // Predicated region
        $region41: #{tpu_custom_call.1} parent=11 // pred_check
          %p319 = pneg %p217
        $region42: #{tpu_custom_call.1} parent=11 // pred_check_branch
          %321 = sbr.rel (%p319) target = $region44
        $region43: #{tpu_custom_call.1} parent=11 // pred_region
          _
        $region44: #{tpu_custom_call.1} parent=11 // pred_fallthru
          _
      $region12: #{tpu_custom_call.1} parent=5 // pred_fallthru
        _
      %p322 = scmp.lt.s32.totalorder %s23, 2
      // Predicated region
      $region45: #{tpu_custom_call.1} parent=5 // pred_check
        %p323 = pneg %p322
      $region46: #{tpu_custom_call.1} parent=5 // pred_check_branch
        %325 = sbr.rel (%p323) target = $region48
      $region47: #{tpu_custom_call.1} parent=5 // pred_region
        // Predicated region
        $region49: #{tpu_custom_call.1} parent=47 // pred_check
          %p326 = pneg %p43
        $region50: #{tpu_custom_call.1} parent=47 // pred_check_branch
          %328 = sbr.rel (%p326) target = $region52
        $region51: #{tpu_custom_call.1} parent=47 // pred_region
          %s329 = sand.u32 %s33, 1
          %s330 = scalar_lea.sflag [#allocation5], %s329
          %s331 = sand.u32 %s33, 1
          %s332 = smul.addr %s331, 8
          %s333 = scalar_lea.vmem [#allocation4], %s332
          %s334 = smul.u32 2, %s23
          %s336 = ssub.s32 128, 128
          %337 = vsyncadd %s330, %s336
          %s338 = smul.addr %s334, 64
          %s339 = scalar_lea.hbm %s0, %s338
          %s340 = sshll.u32 %s333, 4
          %s341 = int_to_ptr.vmem [resolvable:$true] %s340
          %346 = dma.hbm_to_vmem [thread:$0]  %s339, 128, %s341, %s330, 64, 64, 4
        $region52: #{tpu_custom_call.1} parent=47 // pred_fallthru
          _
      $region48: #{tpu_custom_call.1} parent=5 // pred_fallthru
        _
      %p347 = scmp.le.s32.totalorder 1, %s23
      %p348 = scmp.lt.s32.totalorder %s23, 3
      %p349 = pnand %p347, %p348
      %p350 = pneg %p349
      // Predicated region
      $region53: #{tpu_custom_call.1} parent=5 // pred_check
        _
      $region54: #{tpu_custom_call.1} parent=5 // pred_check_branch
        %352 = sbr.rel (%p349) target = $region56
      $region55: #{tpu_custom_call.1} parent=5 // pred_region
        %s353 = ssub.s32 %s23, 1
        %s354 = sand.u32 %s36, 1
        %s355 = scalar_lea.sflag [#allocation5], %s354
        %s356 = sand.u32 %s36, 1
        %s357 = smul.addr %s356, 8
        %s358 = scalar_lea.vmem [#allocation4], %s357
        // Predicated region
        $region57: #{tpu_custom_call.1} parent=55 // pred_check
          %p359 = pneg %p49
        $region58: #{tpu_custom_call.1} parent=55 // pred_check_branch
          %361 = sbr.rel (%p359) target = $region60
        $region59: #{tpu_custom_call.1} parent=55 // pred_region
          %362 = dma.done %s355, 128
        $region60: #{tpu_custom_call.1} parent=55 // pred_fallthru
          _
        // Predicated region
        $region61: #{tpu_custom_call.1} parent=55 // pred_check
          %p363 = pneg %p70
        $region62: #{tpu_custom_call.1} parent=55 // pred_check_branch
          %365 = sbr.rel (%p363) target = $region64
        $region63: #{tpu_custom_call.1} parent=55 // pred_region
          %366 = dma.done [#allocation8], 256
        $region64: #{tpu_custom_call.1} parent=55 // pred_fallthru
          _
        // Predicated region
        $region65: #{tpu_custom_call.1} parent=55 // pred_check
          %p367 = pneg %p112
        $region66: #{tpu_custom_call.1} parent=55 // pred_check_branch
          %369 = sbr.rel (%p367) target = $region68
        $region67: #{tpu_custom_call.1} parent=55 // pred_region
          %370 = dma.done [#allocation8], 10240
        $region68: #{tpu_custom_call.1} parent=55 // pred_fallthru
          _
        // Predicated region
        $region69: #{tpu_custom_call.1} parent=55 // pred_check
          %p371 = pneg %p154
        $region70: #{tpu_custom_call.1} parent=55 // pred_check_branch
          %373 = sbr.rel (%p371) target = $region72
        $region71: #{tpu_custom_call.1} parent=55 // pred_region
          %374 = dma.done [#allocation11], 6144
        $region72: #{tpu_custom_call.1} parent=55 // pred_fallthru
          _
        // Predicated region
        $region73: #{tpu_custom_call.1} parent=55 // pred_check
          %p375 = pneg %p196
        $region74: #{tpu_custom_call.1} parent=55 // pred_check_branch
          %377 = sbr.rel (%p375) target = $region76
        $region75: #{tpu_custom_call.1} parent=55 // pred_region
          %378 = dma.done [#allocation11], 2048
        $region76: #{tpu_custom_call.1} parent=55 // pred_fallthru
          _
        %s379 = sand.u32 %s36, 1
        %s380 = scalar_lea.sflag [#allocation5], %s379
        %s381 = sand.u32 %s36, 1
        %s382 = smul.addr %s381, 8
        %s383 = scalar_lea.vmem [#allocation4], %s382
        %p384 = pneg %p49
        %p385 = pneg %p46
        %p386 = pneg %p70
        %p387 = pneg %p67
        %p388 = pneg %p91
        %p389 = pneg %p88
        %p390 = pneg %p112
        %p391 = pneg %p109
        %p392 = pneg %p133
        %p393 = pneg %p130
        %p394 = pneg %p154
        %p395 = pneg %p151
        %p396 = pneg %p175
        %p397 = pneg %p172
        %p398 = pneg %p196
        %p399 = pneg %p193
        %p400 = pneg %p217
        %p401 = pneg %p214
        %p402 = pneg %p243
        %p403 = pneg %p240
        %s404 = sand.u32 %s230, 1
        %s405 = scalar_lea.sflag [#allocation6], %s404
        %s406 = sand.u32 %s230, 1
        %s407 = scalar_lea.vmem [#allocation13], %s406
        %s408 = smul.u32 2, %s28
        %v410 = vld [vmem:[%s358] sm:$0xf]
        %v411 = vld [vmem:[%s358 + $0x4] sm:$0xf]
        %v412 = vld [vmem:[#allocation7] sm:$0xf]
        %v413 = vld [vmem:[#allocation7 + $0x4] sm:$0xf]
        %v414 = vld [vmem:[#allocation7 + $0x8] sm:$0xf]
        %v415 = vld [vmem:[#allocation7 + $0xc] sm:$0xf]
        %v416 = vld [vmem:[%s2] sm:$0x1]
        %v418 = vlaneseq
        %v419 = vshrl.u32 %v418, 7
        %v420 = vsub.s32 0, %v419
        %v421 = vrot.slane %v416, %v420
        %v425 = vunpack.c.l.b16 %v410
        %v426 = vunpack.c.l.b16 %v411
        %v427 = vpack.c.b16 %v426, %v425
        %v432 = vunpack.c.l.b16 %v412
        %v433 = vunpack.c.l.b16 %v413
        %v434 = vunpack.c.l.b16 %v414
        %v435 = vunpack.c.l.b16 %v415
        %v436 = vpack.c.b16 %v433, %v432
        %v437 = vpack.c.b16 %v435, %v434
        %vm440 = vcmask 261120
        %v442 = vsel %vm440, %v427, 0
        %444 = vmatprep.subr.bf16.mxu0 0
        %445 = vmatpush1.bf16.msra.mxu0 %v436
        %446 = vmatprep.subr.bf16.mxu0 0
        %447 = vmatpush1.bf16.msra.mxu0 %v437
        %448 = vmatprep.subr.bf16.mxu0 0
        %449 = vmatpush1.bf16.msra.mxu0 0
        %450 = vmatprep.subr.bf16.mxu0 0
        %451 = vmatpush1.bf16.msra.mxu0 0
        %452 = vmatprep.subr.bf16.mxu0 0
        %453 = vmatpush1.bf16.msra.mxu0 0
        %454 = vmatprep.subr.bf16.mxu0 0
        %455 = vmatpush1.bf16.msra.mxu0 0
        %456 = vmatprep.subr.bf16.mxu0 0
        %457 = vmatpush1.bf16.msra.mxu0 0
        %458 = vmatprep.subr.bf16.mxu0 0
        %459 = vmatpush1.bf16.msra.mxu0 0
        %460 = vmatprep.subr.bf16.mxu0 0
        %461 = vmatpush1.bf16.msra.mxu0 0
        %462 = vmatprep.subr.bf16.mxu0 0
        %463 = vmatpush1.bf16.msra.mxu0 0
        %464 = vmatprep.subr.bf16.mxu0 0
        %465 = vmatpush1.bf16.msra.mxu0 0
        %466 = vmatprep.subr.bf16.mxu0 0
        %467 = vmatpush1.bf16.msra.mxu0 0
        %468 = vmatprep.subr.bf16.mxu0 0
        %469 = vmatpush1.bf16.msra.mxu0 0
        %470 = vmatprep.subr.bf16.mxu0 0
        %471 = vmatpush1.bf16.msra.mxu0 0
        %472 = vmatprep.subr.bf16.mxu0 0
        %473 = vmatpush1.bf16.msra.mxu0 0
        %474 = vmatprep.subr.bf16.mxu0 0
        %475 = vmatpush1.bf16.msra.mxu0 0
        %476 = vmatprep.mubr.bf16.mxu0 0
        %477 = vmatmul.mubr.bf16.gmra.mrb[0].mxu0 %v442
        %v478 = vpop.f32.mrb[0].mxu0
        %v479 = vadd.f32 %v421, %v478
        %v480 = vpop.f32.mrb[0].mxu0
        %v481 = vpop.f32.mrb[0].mxu0
        %v482 = vadd.f32 %v421, %v481
        %v483 = vpop.f32.mrb[0].mxu0
        %484 = vdwg.mxu0
        %v485 = vmax.f32 %v479, 0.0
        %v486 = vmax.f32 %v482, 0.0
        %v487 = vpack.c.bf16 %v486, %v485
        %v489 = vunpack.c.l.b16 %v487
        %v490 = vunpack.c.h.b16 %v487
        %v491 = vpack.c.b16 %v489, %v489
        %v492 = vpack.c.b16 %v490, %v490
        %495 = vst [vmem:[#allocation2 + $0x8] sm:$0xf] %v491
        %496 = vst [vmem:[#allocation2 + $0xc] sm:$0xf] %v492
        %497 = vst [vmem:[#allocation2 + $0x4] sm:$0x8] 0
        %498 = vst [vmem:[#allocation2 + $0x10] sm:$0x1] 0
        %v499 = vld [vmem:[#allocation2 + $0x4] sm:$0x8]
        %v500 = vld [vmem:[#allocation2 + $0x8] sm:$0xf]
        %v501 = vld [vmem:[#allocation2 + $0xc] sm:$0x7]
        %v502 = vld [vmem:[#allocation9] sm:$0xff]
        %v503 = vld [vmem:[#allocation9 + $0x8] sm:$0xff]
        %v504 = vld [vmem:[#allocation9 + $0x10] sm:$0xff]
        %v505 = vld [vmem:[#allocation9 + $0x18] sm:$0xff]
        %v506 = vld [vmem:[#allocation9 + $0x20] sm:$0xff]
        %v507 = vld [vmem:[#allocation9 + $0x28] sm:$0xff]
        %v508 = vld [vmem:[#allocation9 + $0x30] sm:$0xff]
        %v509 = vld [vmem:[#allocation9 + $0x38] sm:$0xff]
        %v510 = vld [vmem:[#allocation9 + $0x40] sm:$0xff]
        %v511 = vld [vmem:[#allocation9 + $0x48] sm:$0xff]
        %v512 = vld [vmem:[#allocation9 + $0x50] sm:$0xff]
        %v513 = vld [vmem:[#allocation9 + $0x58] sm:$0xff]
        %v514 = vld [vmem:[#allocation9 + $0x60] sm:$0xff]
        %v515 = vld [vmem:[#allocation9 + $0x68] sm:$0xff]
        %v516 = vld [vmem:[#allocation9 + $0x70] sm:$0xff]
        %v517 = vld [vmem:[#allocation9 + $0x78] sm:$0xff]
        %v518 = vld [vmem:[#allocation2 + $0xc] sm:$0xf]
        %v519 = vld [vmem:[#allocation9 + $0x80] sm:$0xff]
        %v520 = vld [vmem:[#allocation9 + $0x88] sm:$0xff]
        %v521 = vld [vmem:[#allocation9 + $0x90] sm:$0xff]
        %v522 = vld [vmem:[#allocation9 + $0x98] sm:$0xff]
        %v523 = vld [vmem:[#allocation9 + $0xa0] sm:$0xff]
        %v524 = vld [vmem:[#allocation9 + $0xa8] sm:$0xff]
        %v525 = vld [vmem:[#allocation9 + $0xb0] sm:$0xff]
        %v526 = vld [vmem:[#allocation9 + $0xb8] sm:$0xff]
        %v527 = vld [vmem:[#allocation9 + $0xc0] sm:$0xff]
        %v528 = vld [vmem:[#allocation9 + $0xc8] sm:$0xff]
        %v529 = vld [vmem:[#allocation9 + $0xd0] sm:$0xff]
        %v530 = vld [vmem:[#allocation9 + $0xd8] sm:$0xff]
        %v531 = vld [vmem:[#allocation9 + $0xe0] sm:$0xff]
        %v532 = vld [vmem:[#allocation9 + $0xe8] sm:$0xff]
        %v533 = vld [vmem:[#allocation9 + $0xf0] sm:$0xff]
        %v534 = vld [vmem:[#allocation9 + $0xf8] sm:$0xff]
        %v538 = vunpack.c.l.b16 %v499
        %v539 = vunpack.c.l.b16 %v500
        %v540 = vunpack.c.l.b16 %v518
        %v541 = vpack.c.b16 %v539, %v538
        %v542 = vpack.c.b16 %v540, %v540
        %vm543 = vsmask.f32 4352
        %v545 = vshrl.u32 %v541, 16
        %v547 = vrot.slane %v545, 3
        %v548 = vshll.u32 %v541, 16
        %v550 = vrot.slane %v548, 4
        %v551 = vor.u32 %v547, %v550
        %v553 = vshrl.u32 %v542, 16
        %v555 = vrot.slane %v553, 3
        %v556 = vshll.u32 %v542, 16
        %v558 = vrot.slane %v556, 4
        %v559 = vor.u32 %v555, %v558
        %v560 = vsel %vm543, %v551, %v559
        %v578 = vunpack.c.l.b16 %v519
        %v579 = vunpack.c.h.b16 %v519
        %v580 = vunpack.c.l.b16 %v520
        %v581 = vunpack.c.h.b16 %v520
        %v582 = vunpack.c.l.b16 %v521
        %v583 = vunpack.c.h.b16 %v521
        %v584 = vunpack.c.l.b16 %v522
        %v585 = vunpack.c.h.b16 %v522
        %v586 = vunpack.c.l.b16 %v523
        %v587 = vunpack.c.h.b16 %v523
        %v588 = vunpack.c.l.b16 %v524
        %v589 = vunpack.c.h.b16 %v524
        %v590 = vunpack.c.l.b16 %v525
        %v591 = vunpack.c.h.b16 %v525
        %v592 = vunpack.c.l.b16 %v526
        %v593 = vunpack.c.h.b16 %v526
        %v594 = vunpack.c.l.b16 %v527
        %v595 = vunpack.c.h.b16 %v527
        %v596 = vunpack.c.l.b16 %v528
        %v597 = vunpack.c.h.b16 %v528
        %v598 = vunpack.c.l.b16 %v529
        %v599 = vunpack.c.h.b16 %v529
        %v600 = vunpack.c.l.b16 %v530
        %v601 = vunpack.c.h.b16 %v530
        %v602 = vunpack.c.l.b16 %v531
        %v603 = vunpack.c.h.b16 %v531
        %v604 = vunpack.c.l.b16 %v532
        %v605 = vunpack.c.h.b16 %v532
        %v606 = vunpack.c.l.b16 %v533
        %v607 = vunpack.c.h.b16 %v533
        %v608 = vunpack.c.l.b16 %v534
        %v609 = vunpack.c.h.b16 %v534
        %v610 = vpack.c.b16 %v580, %v578
        %v611 = vpack.c.b16 %v581, %v579
        %v612 = vpack.c.b16 %v584, %v582
        %v613 = vpack.c.b16 %v585, %v583
        %v614 = vpack.c.b16 %v588, %v586
        %v615 = vpack.c.b16 %v589, %v587
        %v616 = vpack.c.b16 %v592, %v590
        %v617 = vpack.c.b16 %v593, %v591
        %v618 = vpack.c.b16 %v596, %v594
        %v619 = vpack.c.b16 %v597, %v595
        %v620 = vpack.c.b16 %v600, %v598
        %v621 = vpack.c.b16 %v601, %v599
        %v622 = vpack.c.b16 %v604, %v602
        %v623 = vpack.c.b16 %v605, %v603
        %v624 = vpack.c.b16 %v608, %v606
        %v625 = vpack.c.b16 %v609, %v607
        %642 = vmatprep.subr.bf16.mxu0 %v611
        %643 = vmatpush1.bf16.msra.mxu0 %v610
        %644 = vmatprep.subr.bf16.mxu0 %v613
        %645 = vmatpush1.bf16.msra.mxu0 %v612
        %646 = vmatprep.subr.bf16.mxu0 %v615
        %647 = vmatpush1.bf16.msra.mxu0 %v614
        %648 = vmatprep.subr.bf16.mxu0 %v617
        %649 = vmatpush1.bf16.msra.mxu0 %v616
        %650 = vmatprep.subr.bf16.mxu0 %v619
        %651 = vmatpush1.bf16.msra.mxu0 %v618
        %652 = vmatprep.subr.bf16.mxu0 %v621
        %653 = vmatpush1.bf16.msra.mxu0 %v620
        %654 = vmatprep.subr.bf16.mxu0 %v623
        %655 = vmatpush1.bf16.msra.mxu0 %v622
        %656 = vmatprep.subr.bf16.mxu0 %v625
        %657 = vmatpush1.bf16.msra.mxu0 %v624
        %658 = vmatprep.subr.bf16.mxu0 0
        %659 = vmatpush1.bf16.msra.mxu0 0
        %660 = vmatprep.subr.bf16.mxu0 0
        %661 = vmatpush1.bf16.msra.mxu0 0
        %662 = vmatprep.subr.bf16.mxu0 0
        %663 = vmatpush1.bf16.msra.mxu0 0
        %664 = vmatprep.subr.bf16.mxu0 0
        %665 = vmatpush1.bf16.msra.mxu0 0
        %666 = vmatprep.subr.bf16.mxu0 0
        %667 = vmatpush1.bf16.msra.mxu0 0
        %668 = vmatprep.subr.bf16.mxu0 0
        %669 = vmatpush1.bf16.msra.mxu0 0
        %670 = vmatprep.subr.bf16.mxu0 0
        %671 = vmatpush1.bf16.msra.mxu0 0
        %672 = vmatprep.subr.bf16.mxu0 0
        %673 = vmatpush1.bf16.msra.mxu0 0
        %674 = vmatprep.mubr.bf16.mxu0 0
        %675 = vmatmul.mubr.bf16.gmra.mrb[0].mxu0 %v560
        %v676 = vpop.f32.mrb[0].mxu0
        %v677 = vadd.f32 0.0, %v676
        %v678 = vpop.f32.mrb[0].mxu0
        %v679 = vadd.f32 0.0, %v678
        %v680 = vpop.f32.mrb[0].mxu0
        %v681 = vadd.f32 0.0, %v680
        %v682 = vpop.f32.mrb[0].mxu0
        %v683 = vadd.f32 0.0, %v682
        %684 = vdwg.mxu0
        %v686 = vunpack.c.l.b16 %v501
        %v687 = vpack.c.b16 %v686, %v686
        %vm688 = vcmask 1044480
        %v689 = vrot.slane %v541, 3
        %v690 = vrot.slane %v687, 3
        %v691 = vsel %vm688, %v689, %v690
        %v709 = vunpack.c.l.b16 %v502
        %v710 = vunpack.c.h.b16 %v502
        %v711 = vunpack.c.l.b16 %v503
        %v712 = vunpack.c.h.b16 %v503
        %v713 = vunpack.c.l.b16 %v504
        %v714 = vunpack.c.h.b16 %v504
        %v715 = vunpack.c.l.b16 %v505
        %v716 = vunpack.c.h.b16 %v505
        %v717 = vunpack.c.l.b16 %v506
        %v718 = vunpack.c.h.b16 %v506
        %v719 = vunpack.c.l.b16 %v507
        %v720 = vunpack.c.h.b16 %v507
        %v721 = vunpack.c.l.b16 %v508
        %v722 = vunpack.c.h.b16 %v508
        %v723 = vunpack.c.l.b16 %v509
        %v724 = vunpack.c.h.b16 %v509
        %v725 = vunpack.c.l.b16 %v510
        %v726 = vunpack.c.h.b16 %v510
        %v727 = vunpack.c.l.b16 %v511
        %v728 = vunpack.c.h.b16 %v511
        %v729 = vunpack.c.l.b16 %v512
        %v730 = vunpack.c.h.b16 %v512
        %v731 = vunpack.c.l.b16 %v513
        %v732 = vunpack.c.h.b16 %v513
        %v733 = vunpack.c.l.b16 %v514
        %v734 = vunpack.c.h.b16 %v514
        %v735 = vunpack.c.l.b16 %v515
        %v736 = vunpack.c.h.b16 %v515
        %v737 = vunpack.c.l.b16 %v516
        %v738 = vunpack.c.h.b16 %v516
        %v739 = vunpack.c.l.b16 %v517
        %v740 = vunpack.c.h.b16 %v517
        %v741 = vpack.c.b16 %v711, %v709
        %v742 = vpack.c.b16 %v712, %v710
        %v743 = vpack.c.b16 %v715, %v713
        %v744 = vpack.c.b16 %v716, %v714
        %v745 = vpack.c.b16 %v719, %v717
        %v746 = vpack.c.b16 %v720, %v718
        %v747 = vpack.c.b16 %v723, %v721
        %v748 = vpack.c.b16 %v724, %v722
        %v749 = vpack.c.b16 %v727, %v725
        %v750 = vpack.c.b16 %v728, %v726
        %v751 = vpack.c.b16 %v731, %v729
        %v752 = vpack.c.b16 %v732, %v730
        %v753 = vpack.c.b16 %v735, %v733
        %v754 = vpack.c.b16 %v736, %v734
        %v755 = vpack.c.b16 %v739, %v737
        %v756 = vpack.c.b16 %v740, %v738
        %773 = vmatprep.subr.bf16.mxu0 %v742
        %774 = vmatpush1.bf16.msra.mxu0 %v741
        %775 = vmatprep.subr.bf16.mxu0 %v744
        %776 = vmatpush1.bf16.msra.mxu0 %v743
        %777 = vmatprep.subr.bf16.mxu0 %v746
        %778 = vmatpush1.bf16.msra.mxu0 %v745
        %779 = vmatprep.subr.bf16.mxu0 %v748
        %780 = vmatpush1.bf16.msra.mxu0 %v747
        %781 = vmatprep.subr.bf16.mxu0 %v750
        %782 = vmatpush1.bf16.msra.mxu0 %v749
        %783 = vmatprep.subr.bf16.mxu0 %v752
        %784 = vmatpush1.bf16.msra.mxu0 %v751
        %785 = vmatprep.subr.bf16.mxu0 %v754
        %786 = vmatpush1.bf16.msra.mxu0 %v753
        %787 = vmatprep.subr.bf16.mxu0 %v756
        %788 = vmatpush1.bf16.msra.mxu0 %v755
        %789 = vmatprep.subr.bf16.mxu0 0
        %790 = vmatpush1.bf16.msra.mxu0 0
        %791 = vmatprep.subr.bf16.mxu0 0
        %792 = vmatpush1.bf16.msra.mxu0 0
        %793 = vmatprep.subr.bf16.mxu0 0
        %794 = vmatpush1.bf16.msra.mxu0 0
        %795 = vmatprep.subr.bf16.mxu0 0
        %796 = vmatpush1.bf16.msra.mxu0 0
        %797 = vmatprep.subr.bf16.mxu0 0
        %798 = vmatpush1.bf16.msra.mxu0 0
        %799 = vmatprep.subr.bf16.mxu0 0
        %800 = vmatpush1.bf16.msra.mxu0 0
        %801 = vmatprep.subr.bf16.mxu0 0
        %802 = vmatpush1.bf16.msra.mxu0 0
        %803 = vmatprep.subr.bf16.mxu0 0
        %804 = vmatpush1.bf16.msra.mxu0 0
        %805 = vmatprep.mubr.bf16.mxu0 0
        %806 = vmatmul.mubr.bf16.gmra.mrb[0].mxu0 %v691
        %v807 = vpop.f32.mrb[0].mxu0
        %v808 = vadd.f32 %v677, %v807
        %v809 = vpop.f32.mrb[0].mxu0
        %v810 = vadd.f32 %v679, %v809
        %v811 = vpop.f32.mrb[0].mxu0
        %v812 = vadd.f32 %v681, %v811
        %v813 = vpop.f32.mrb[0].mxu0
        %v814 = vadd.f32 %v683, %v813
        %815 = vdwg.mxu0
        %v816 = vld [vmem:[#allocation9 + $0x100] sm:$0xff]
        %v817 = vld [vmem:[#allocation9 + $0x108] sm:$0xff]
        %v818 = vld [vmem:[#allocation9 + $0x110] sm:$0xff]
        %v819 = vld [vmem:[#allocation9 + $0x118] sm:$0xff]
        %v820 = vld [vmem:[#allocation9 + $0x120] sm:$0xff]
        %v821 = vld [vmem:[#allocation9 + $0x128] sm:$0xff]
        %v822 = vld [vmem:[#allocation9 + $0x130] sm:$0xff]
        %v823 = vld [vmem:[#allocation9 + $0x138] sm:$0xff]
        %v824 = vld [vmem:[#allocation9 + $0x140] sm:$0xff]
        %v825 = vld [vmem:[#allocation9 + $0x148] sm:$0xff]
        %v826 = vld [vmem:[#allocation9 + $0x150] sm:$0xff]
        %v827 = vld [vmem:[#allocation9 + $0x158] sm:$0xff]
        %v828 = vld [vmem:[#allocation9 + $0x160] sm:$0xff]
        %v829 = vld [vmem:[#allocation9 + $0x168] sm:$0xff]
        %v830 = vld [vmem:[#allocation9 + $0x170] sm:$0xff]
        %v831 = vld [vmem:[#allocation9 + $0x178] sm:$0xff]
        %v832 = vpack.c.b16 %v540, %v539
        %v850 = vunpack.c.l.b16 %v816
        %v851 = vunpack.c.h.b16 %v816
        %v852 = vunpack.c.l.b16 %v817
        %v853 = vunpack.c.h.b16 %v817
        %v854 = vunpack.c.l.b16 %v818
        %v855 = vunpack.c.h.b16 %v818
        %v856 = vunpack.c.l.b16 %v819
        %v857 = vunpack.c.h.b16 %v819
        %v858 = vunpack.c.l.b16 %v820
        %v859 = vunpack.c.h.b16 %v820
        %v860 = vunpack.c.l.b16 %v821
        %v861 = vunpack.c.h.b16 %v821
        %v862 = vunpack.c.l.b16 %v822
        %v863 = vunpack.c.h.b16 %v822
        %v864 = vunpack.c.l.b16 %v823
        %v865 = vunpack.c.h.b16 %v823
        %v866 = vunpack.c.l.b16 %v824
        %v867 = vunpack.c.h.b16 %v824
        %v868 = vunpack.c.l.b16 %v825
        %v869 = vunpack.c.h.b16 %v825
        %v870 = vunpack.c.l.b16 %v826
        %v871 = vunpack.c.h.b16 %v826
        %v872 = vunpack.c.l.b16 %v827
        %v873 = vunpack.c.h.b16 %v827
        %v874 = vunpack.c.l.b16 %v828
        %v875 = vunpack.c.h.b16 %v828
        %v876 = vunpack.c.l.b16 %v829
        %v877 = vunpack.c.h.b16 %v829
        %v878 = vunpack.c.l.b16 %v830
        %v879 = vunpack.c.h.b16 %v830
        %v880 = vunpack.c.l.b16 %v831
        %v881 = vunpack.c.h.b16 %v831
        %v882 = vpack.c.b16 %v852, %v850
        %v883 = vpack.c.b16 %v853, %v851
        %v884 = vpack.c.b16 %v856, %v854
        %v885 = vpack.c.b16 %v857, %v855
        %v886 = vpack.c.b16 %v860, %v858
        %v887 = vpack.c.b16 %v861, %v859
        %v888 = vpack.c.b16 %v864, %v862
        %v889 = vpack.c.b16 %v865, %v863
        %v890 = vpack.c.b16 %v868, %v866
        %v891 = vpack.c.b16 %v869, %v867
        %v892 = vpack.c.b16 %v872, %v870
        %v893 = vpack.c.b16 %v873, %v871
        %v894 = vpack.c.b16 %v876, %v874
        %v895 = vpack.c.b16 %v877, %v875
        %v896 = vpack.c.b16 %v880, %v878
        %v897 = vpack.c.b16 %v881, %v879
        %914 = vmatprep.subr.bf16.mxu0 %v883
        %915 = vmatpush1.bf16.msra.mxu0 %v882
        %916 = vmatprep.subr.bf16.mxu0 %v885
        %917 = vmatpush1.bf16.msra.mxu0 %v884
        %918 = vmatprep.subr.bf16.mxu0 %v887
        %919 = vmatpush1.bf16.msra.mxu0 %v886
        %920 = vmatprep.subr.bf16.mxu0 %v889
        %921 = vmatpush1.bf16.msra.mxu0 %v888
        %922 = vmatprep.subr.bf16.mxu0 %v891
        %923 = vmatpush1.bf16.msra.mxu0 %v890
        %924 = vmatprep.subr.bf16.mxu0 %v893
        %925 = vmatpush1.bf16.msra.mxu0 %v892
        %926 = vmatprep.subr.bf16.mxu0 %v895
        %927 = vmatpush1.bf16.msra.mxu0 %v894
        %928 = vmatprep.subr.bf16.mxu0 %v897
        %929 = vmatpush1.bf16.msra.mxu0 %v896
        %930 = vmatprep.subr.bf16.mxu0 0
        %931 = vmatpush1.bf16.msra.mxu0 0
        %932 = vmatprep.subr.bf16.mxu0 0
        %933 = vmatpush1.bf16.msra.mxu0 0
        %934 = vmatprep.subr.bf16.mxu0 0
        %935 = vmatpush1.bf16.msra.mxu0 0
        %936 = vmatprep.subr.bf16.mxu0 0
        %937 = vmatpush1.bf16.msra.mxu0 0
        %938 = vmatprep.subr.bf16.mxu0 0
        %939 = vmatpush1.bf16.msra.mxu0 0
        %940 = vmatprep.subr.bf16.mxu0 0
        %941 = vmatpush1.bf16.msra.mxu0 0
        %942 = vmatprep.subr.bf16.mxu0 0
        %943 = vmatpush1.bf16.msra.mxu0 0
        %944 = vmatprep.subr.bf16.mxu0 0
        %945 = vmatpush1.bf16.msra.mxu0 0
        %946 = vmatprep.mubr.bf16.mxu0 0
        %947 = vmatmul.mubr.bf16.gmra.mrb[0].mxu0 %v832
        %v948 = vpop.f32.mrb[0].mxu0
        %v949 = vadd.f32 0.0, %v948
        %v950 = vpop.f32.mrb[0].mxu0
        %v951 = vadd.f32 0.0, %v950
        %v952 = vpop.f32.mrb[0].mxu0
        %v953 = vadd.f32 0.0, %v952
        %v954 = vpop.f32.mrb[0].mxu0
        %v955 = vadd.f32 0.0, %v954
        %956 = vdwg.mxu0
        %v957 = vadd.f32 %v808, %v949
        %v958 = vadd.f32 %v810, %v951
        %v959 = vadd.f32 %v812, %v953
        %v960 = vadd.f32 %v814, %v955
        %v961 = vld [vmem:[#allocation2 + $0x8] sm:$0xf]
        %v962 = vld [vmem:[#allocation2 + $0xc] sm:$0xf]
        %v963 = vld [vmem:[#allocation2 + $0x10] sm:$0x1]
        %v964 = vld [vmem:[#allocation9 + $0x180] sm:$0xff]
        %v965 = vld [vmem:[#allocation9 + $0x188] sm:$0xff]
        %v966 = vld [vmem:[#allocation9 + $0x190] sm:$0xff]
        %v967 = vld [vmem:[#allocation9 + $0x198] sm:$0xff]
        %v968 = vld [vmem:[#allocation9 + $0x1a0] sm:$0xff]
        %v969 = vld [vmem:[#allocation9 + $0x1a8] sm:$0xff]
        %v970 = vld [vmem:[#allocation9 + $0x1b0] sm:$0xff]
        %v971 = vld [vmem:[#allocation9 + $0x1b8] sm:$0xff]
        %v972 = vld [vmem:[#allocation9 + $0x1c0] sm:$0xff]
        %v973 = vld [vmem:[#allocation9 + $0x1c8] sm:$0xff]
        %v974 = vld [vmem:[#allocation9 + $0x1d0] sm:$0xff]
        %v975 = vld [vmem:[#allocation9 + $0x1d8] sm:$0xff]
        %v976 = vld [vmem:[#allocation9 + $0x1e0] sm:$0xff]
        %v977 = vld [vmem:[#allocation9 + $0x1e8] sm:$0xff]
        %v978 = vld [vmem:[#allocation9 + $0x1f0] sm:$0xff]
        %v979 = vld [vmem:[#allocation9 + $0x1f8] sm:$0xff]
        %v983 = vunpack.c.l.b16 %v961
        %v984 = vunpack.c.l.b16 %v962
        %v985 = vunpack.c.l.b16 %v963
        %v986 = vpack.c.b16 %v984, %v983
        %v987 = vpack.c.b16 %v985, %v985
        %vm988 = vsmask.f32 7424
        %v990 = vshrl.u32 %v986, 16
        %v992 = vshll.u32 %v986, 16
        %v994 = vrot.slane %v992, 1
        %v995 = vor.u32 %v990, %v994
        %v997 = vshll.u32 %v987, 16
        %v999 = vrot.slane %v997, 1
        %v1000 = vsel %vm988, %v995, %v999
        %v1018 = vunpack.c.l.b16 %v964
        %v1019 = vunpack.c.h.b16 %v964
        %v1020 = vunpack.c.l.b16 %v965
        %v1021 = vunpack.c.h.b16 %v965
        %v1022 = vunpack.c.l.b16 %v966
        %v1023 = vunpack.c.h.b16 %v966
        %v1024 = vunpack.c.l.b16 %v967
        %v1025 = vunpack.c.h.b16 %v967
        %v1026 = vunpack.c.l.b16 %v968
        %v1027 = vunpack.c.h.b16 %v968
        %v1028 = vunpack.c.l.b16 %v969
        %v1029 = vunpack.c.h.b16 %v969
        %v1030 = vunpack.c.l.b16 %v970
        %v1031 = vunpack.c.h.b16 %v970
        %v1032 = vunpack.c.l.b16 %v971
        %v1033 = vunpack.c.h.b16 %v971
        %v1034 = vunpack.c.l.b16 %v972
        %v1035 = vunpack.c.h.b16 %v972
        %v1036 = vunpack.c.l.b16 %v973
        %v1037 = vunpack.c.h.b16 %v973
        %v1038 = vunpack.c.l.b16 %v974
        %v1039 = vunpack.c.h.b16 %v974
        %v1040 = vunpack.c.l.b16 %v975
        %v1041 = vunpack.c.h.b16 %v975
        %v1042 = vunpack.c.l.b16 %v976
        %v1043 = vunpack.c.h.b16 %v976
        %v1044 = vunpack.c.l.b16 %v977
        %v1045 = vunpack.c.h.b16 %v977
        %v1046 = vunpack.c.l.b16 %v978
        %v1047 = vunpack.c.h.b16 %v978
        %v1048 = vunpack.c.l.b16 %v979
        %v1049 = vunpack.c.h.b16 %v979
        %v1050 = vpack.c.b16 %v1020, %v1018
        %v1051 = vpack.c.b16 %v1021, %v1019
        %v1052 = vpack.c.b16 %v1024, %v1022
        %v1053 = vpack.c.b16 %v1025, %v1023
        %v1054 = vpack.c.b16 %v1028, %v1026
        %v1055 = vpack.c.b16 %v1029, %v1027
        %v1056 = vpack.c.b16 %v1032, %v1030
        %v1057 = vpack.c.b16 %v1033, %v1031
        %v1058 = vpack.c.b16 %v1036, %v1034
        %v1059 = vpack.c.b16 %v1037, %v1035
        %v1060 = vpack.c.b16 %v1040, %v1038
        %v1061 = vpack.c.b16 %v1041, %v1039
        %v1062 = vpack.c.b16 %v1044, %v1042
        %v1063 = vpack.c.b16 %v1045, %v1043
        %v1064 = vpack.c.b16 %v1048, %v1046
        %v1065 = vpack.c.b16 %v1049, %v1047
        %1082 = vmatprep.subr.bf16.mxu0 %v1051
        %1083 = vmatpush1.bf16.msra.mxu0 %v1050
        %1084 = vmatprep.subr.bf16.mxu0 %v1053
        %1085 = vmatpush1.bf16.msra.mxu0 %v1052
        %1086 = vmatprep.subr.bf16.mxu0 %v1055
        %1087 = vmatpush1.bf16.msra.mxu0 %v1054
        %1088 = vmatprep.subr.bf16.mxu0 %v1057
        %1089 = vmatpush1.bf16.msra.mxu0 %v1056
        %1090 = vmatprep.subr.bf16.mxu0 %v1059
        %1091 = vmatpush1.bf16.msra.mxu0 %v1058
        %1092 = vmatprep.subr.bf16.mxu0 %v1061
        %1093 = vmatpush1.bf16.msra.mxu0 %v1060
        %1094 = vmatprep.subr.bf16.mxu0 %v1063
        %1095 = vmatpush1.bf16.msra.mxu0 %v1062
        %1096 = vmatprep.subr.bf16.mxu0 %v1065
        %1097 = vmatpush1.bf16.msra.mxu0 %v1064
        %1098 = vmatprep.subr.bf16.mxu0 0
        %1099 = vmatpush1.bf16.msra.mxu0 0
        %1100 = vmatprep.subr.bf16.mxu0 0
        %1101 = vmatpush1.bf16.msra.mxu0 0
        %1102 = vmatprep.subr.bf16.mxu0 0
        %1103 = vmatpush1.bf16.msra.mxu0 0
        %1104 = vmatprep.subr.bf16.mxu0 0
        %1105 = vmatpush1.bf16.msra.mxu0 0
        %1106 = vmatprep.subr.bf16.mxu0 0
        %1107 = vmatpush1.bf16.msra.mxu0 0
        %1108 = vmatprep.subr.bf16.mxu0 0
        %1109 = vmatpush1.bf16.msra.mxu0 0
        %1110 = vmatprep.subr.bf16.mxu0 0
        %1111 = vmatpush1.bf16.msra.mxu0 0
        %1112 = vmatprep.subr.bf16.mxu0 0
        %1113 = vmatpush1.bf16.msra.mxu0 0
        %1114 = vmatprep.mubr.bf16.mxu0 0
        %1115 = vmatmul.mubr.bf16.gmra.mrb[0].mxu0 %v1000
        %v1116 = vpop.f32.mrb[0].mxu0
        %v1117 = vadd.f32 0.0, %v1116
        %v1118 = vpop.f32.mrb[0].mxu0
        %v1119 = vadd.f32 0.0, %v1118
        %v1120 = vpop.f32.mrb[0].mxu0
        %v1121 = vadd.f32 0.0, %v1120
        %v1122 = vpop.f32.mrb[0].mxu0
        %v1123 = vadd.f32 0.0, %v1122
        %1124 = vdwg.mxu0
        %v1125 = vadd.f32 %v957, %v1117
        %v1126 = vadd.f32 %v958, %v1119
        %v1127 = vadd.f32 %v959, %v1121
        %v1128 = vadd.f32 %v960, %v1123
        %v1129 = vld [vmem:[#allocation2 + $0x8] sm:$0xe]
        %v1130 = vld [vmem:[#allocation9 + $0x200] sm:$0xff]
        %v1131 = vld [vmem:[#allocation9 + $0x208] sm:$0xff]
        %v1132 = vld [vmem:[#allocation9 + $0x210] sm:$0xff]
        %v1133 = vld [vmem:[#allocation9 + $0x218] sm:$0xff]
        %v1134 = vld [vmem:[#allocation9 + $0x220] sm:$0xff]
        %v1135 = vld [vmem:[#allocation9 + $0x228] sm:$0xff]
        %v1136 = vld [vmem:[#allocation9 + $0x230] sm:$0xff]
        %v1137 = vld [vmem:[#allocation9 + $0x238] sm:$0xff]
        %v1138 = vld [vmem:[#allocation9 + $0x240] sm:$0xff]
        %v1139 = vld [vmem:[#allocation9 + $0x248] sm:$0xff]
        %v1140 = vld [vmem:[#allocation9 + $0x250] sm:$0xff]
        %v1141 = vld [vmem:[#allocation9 + $0x258] sm:$0xff]
        %v1142 = vld [vmem:[#allocation9 + $0x260] sm:$0xff]
        %v1143 = vld [vmem:[#allocation9 + $0x268] sm:$0xff]
        %v1144 = vld [vmem:[#allocation9 + $0x270] sm:$0xff]
        %v1145 = vld [vmem:[#allocation9 + $0x278] sm:$0xff]
        %v1147 = vunpack.c.l.b16 %v1129
        %v1148 = vpack.c.b16 %v984, %v1147
        %vm1149 = vcmask 1046528
        %v1150 = vrot.slane %v1148, 1
        %v1151 = vrot.slane %v987, 1
        %v1152 = vsel %vm1149, %v1150, %v1151
        %v1170 = vunpack.c.l.b16 %v1130
        %v1171 = vunpack.c.h.b16 %v1130
        %v1172 = vunpack.c.l.b16 %v1131
        %v1173 = vunpack.c.h.b16 %v1131
        %v1174 = vunpack.c.l.b16 %v1132
        %v1175 = vunpack.c.h.b16 %v1132
        %v1176 = vunpack.c.l.b16 %v1133
        %v1177 = vunpack.c.h.b16 %v1133
        %v1178 = vunpack.c.l.b16 %v1134
        %v1179 = vunpack.c.h.b16 %v1134
        %v1180 = vunpack.c.l.b16 %v1135
        %v1181 = vunpack.c.h.b16 %v1135
        %v1182 = vunpack.c.l.b16 %v1136
        %v1183 = vunpack.c.h.b16 %v1136
        %v1184 = vunpack.c.l.b16 %v1137
        %v1185 = vunpack.c.h.b16 %v1137
        %v1186 = vunpack.c.l.b16 %v1138
        %v1187 = vunpack.c.h.b16 %v1138
        %v1188 = vunpack.c.l.b16 %v1139
        %v1189 = vunpack.c.h.b16 %v1139
        %v1190 = vunpack.c.l.b16 %v1140
        %v1191 = vunpack.c.h.b16 %v1140
        %v1192 = vunpack.c.l.b16 %v1141
        %v1193 = vunpack.c.h.b16 %v1141
        %v1194 = vunpack.c.l.b16 %v1142
        %v1195 = vunpack.c.h.b16 %v1142
        %v1196 = vunpack.c.l.b16 %v1143
        %v1197 = vunpack.c.h.b16 %v1143
        %v1198 = vunpack.c.l.b16 %v1144
        %v1199 = vunpack.c.h.b16 %v1144
        %v1200 = vunpack.c.l.b16 %v1145
        %v1201 = vunpack.c.h.b16 %v1145
        %v1202 = vpack.c.b16 %v1172, %v1170
        %v1203 = vpack.c.b16 %v1173, %v1171
        %v1204 = vpack.c.b16 %v1176, %v1174
        %v1205 = vpack.c.b16 %v1177, %v1175
        %v1206 = vpack.c.b16 %v1180, %v1178
        %v1207 = vpack.c.b16 %v1181, %v1179
        %v1208 = vpack.c.b16 %v1184, %v1182
        %v1209 = vpack.c.b16 %v1185, %v1183
        %v1210 = vpack.c.b16 %v1188, %v1186
        %v1211 = vpack.c.b16 %v1189, %v1187
        %v1212 = vpack.c.b16 %v1192, %v1190
        %v1213 = vpack.c.b16 %v1193, %v1191
        %v1214 = vpack.c.b16 %v1196, %v1194
        %v1215 = vpack.c.b16 %v1197, %v1195
        %v1216 = vpack.c.b16 %v1200, %v1198
        %v1217 = vpack.c.b16 %v1201, %v1199
        %1234 = vmatprep.subr.bf16.mxu0 %v1203
        %1235 = vmatpush1.bf16.msra.mxu0 %v1202
        %1236 = vmatprep.subr.bf16.mxu0 %v1205
        %1237 = vmatpush1.bf16.msra.mxu0 %v1204
        %1238 = vmatprep.subr.bf16.mxu0 %v1207
        %1239 = vmatpush1.bf16.msra.mxu0 %v1206
        %1240 = vmatprep.subr.bf16.mxu0 %v1209
        %1241 = vmatpush1.bf16.msra.mxu0 %v1208
        %1242 = vmatprep.subr.bf16.mxu0 %v1211
        %1243 = vmatpush1.bf16.msra.mxu0 %v1210
        %1244 = vmatprep.subr.bf16.mxu0 %v1213
        %1245 = vmatpush1.bf16.msra.mxu0 %v1212
        %1246 = vmatprep.subr.bf16.mxu0 %v1215
        %1247 = vmatpush1.bf16.msra.mxu0 %v1214
        %1248 = vmatprep.subr.bf16.mxu0 %v1217
        %1249 = vmatpush1.bf16.msra.mxu0 %v1216
        %1250 = vmatprep.subr.bf16.mxu0 0
        %1251 = vmatpush1.bf16.msra.mxu0 0
        %1252 = vmatprep.subr.bf16.mxu0 0
        %1253 = vmatpush1.bf16.msra.mxu0 0
        %1254 = vmatprep.subr.bf16.mxu0 0
        %1255 = vmatpush1.bf16.msra.mxu0 0
        %1256 = vmatprep.subr.bf16.mxu0 0
        %1257 = vmatpush1.bf16.msra.mxu0 0
        %1258 = vmatprep.subr.bf16.mxu0 0
        %1259 = vmatpush1.bf16.msra.mxu0 0
        %1260 = vmatprep.subr.bf16.mxu0 0
        %1261 = vmatpush1.bf16.msra.mxu0 0
        %1262 = vmatprep.subr.bf16.mxu0 0
        %1263 = vmatpush1.bf16.msra.mxu0 0
        %1264 = vmatprep.subr.bf16.mxu0 0
        %1265 = vmatpush1.bf16.msra.mxu0 0
        %1266 = vmatprep.mubr.bf16.mxu0 0
        %1267 = vmatmul.mubr.bf16.gmra.mrb[0].mxu0 %v1152
        %v1268 = vpop.f32.mrb[0].mxu0
        %v1269 = vadd.f32 0.0, %v1268
        %v1270 = vpop.f32.mrb[0].mxu0
        %v1271 = vadd.f32 0.0, %v1270
        %v1272 = vpop.f32.mrb[0].mxu0
        %v1273 = vadd.f32 0.0, %v1272
        %v1274 = vpop.f32.mrb[0].mxu0
        %v1275 = vadd.f32 0.0, %v1274
        %1276 = vdwg.mxu0
        %v1277 = vadd.f32 %v1125, %v1269
        %v1278 = vadd.f32 %v1126, %v1271
        %v1279 = vadd.f32 %v1127, %v1273
        %v1280 = vadd.f32 %v1128, %v1275
        %v1281 = vld [vmem:[%s4] sm:$0x3]
        %v1283 = vlaneseq
        %v1284 = vshrl.u32 %v1283, 7
        %v1285 = vsub.s32 0, %v1284
        %v1286 = vrot.slane %v1281, %v1285
        %v1287 = vlaneseq
        %v1288 = vshrl.u32 %v1287, 7
        %v1289 = vsub.s32 1, %v1288
        %v1290 = vrot.slane %v1281, %v1289
        %v1293 = vadd.f32 %v1277, %v1286
        %v1294 = vadd.f32 %v1278, %v1290
        %v1295 = vadd.f32 %v1279, %v1286
        %v1296 = vadd.f32 %v1280, %v1290
        %v1297 = vmax.f32 %v1293, 0.0
        %v1298 = vmax.f32 %v1294, 0.0
        %v1299 = vmax.f32 %v1295, 0.0
        %v1300 = vmax.f32 %v1296, 0.0
        %v1301 = vpack.c.bf16 %v1299, %v1297
        %v1302 = vpack.c.bf16 %v1300, %v1298
        %v1305 = vunpack.c.l.b16 %v1301
        %v1306 = vunpack.c.l.b16 %v1302
        %v1307 = vunpack.c.h.b16 %v1301
        %v1308 = vunpack.c.h.b16 %v1302
        %v1309 = vpack.c.b16 %v1306, %v1305
        %v1310 = vpack.c.b16 %v1308, %v1307
        %1313 = vst [vmem:[#allocation3 + $0x10] sm:$0xff] %v1309
        %1314 = vst [vmem:[#allocation3 + $0x18] sm:$0xff] %v1310
        %vm1315 = vcmask 1043459
        %vm1316 = vsmask.f32 7950
        %vm1317 = vmand %vm1315, %vm1316
        %vm1318 = vcmask 1047559
        %vm1319 = vsmask.f32 7966
        %vm1320 = vmand %vm1318, %vm1319
        %vm1321 = vmor %vm1320, %vm1317
        %v1322 = vld [vmem:[#allocation3 + $0x8] sm:$0x88]
        %v1323 = vsel %vm1321, 0, %v1322
        %1324 = vst [vmem:[#allocation3 + $0x8] sm:$0x88] %v1323
        %vm1325 = vcmask 1040384
        %vm1326 = vsmask.f32 256
        %vm1327 = vmand %vm1325, %vm1326
        %vm1328 = vcmask 1044484
        %vm1329 = vmand %vm1328, %vm543
        %vm1330 = vmor %vm1329, %vm1327
        %v1331 = vld [vmem:[#allocation3 + $0x20] sm:$0x11]
        %v1332 = vsel %vm1330, 0, %v1331
        %1333 = vst [vmem:[#allocation3 + $0x20] sm:$0x11] %v1332
        %v1334 = vld [vmem:[#allocation3 + $0x8] sm:$0x88]
        %v1335 = vld [vmem:[#allocation3 + $0x10] sm:$0xff]
        %v1336 = vld [vmem:[#allocation3 + $0x18] sm:$0xff]
        %v1337 = vld [vmem:[#allocation10] sm:$0xf]
        %v1338 = vld [vmem:[#allocation10 + $0x4] sm:$0xf]
        %v1339 = vld [vmem:[#allocation10 + $0x8] sm:$0xf]
        %v1340 = vld [vmem:[#allocation10 + $0xc] sm:$0xf]
        %v1341 = vld [vmem:[#allocation10 + $0x10] sm:$0xf]
        %v1342 = vld [vmem:[#allocation10 + $0x14] sm:$0xf]
        %v1343 = vld [vmem:[#allocation10 + $0x18] sm:$0xf]
        %v1344 = vld [vmem:[#allocation10 + $0x1c] sm:$0xf]
        %v1345 = vld [vmem:[#allocation10 + $0x20] sm:$0xf]
        %v1346 = vld [vmem:[#allocation10 + $0x24] sm:$0xf]
        %v1347 = vld [vmem:[#allocation10 + $0x28] sm:$0xf]
        %v1348 = vld [vmem:[#allocation10 + $0x2c] sm:$0xf]
        %v1349 = vld [vmem:[#allocation10 + $0x30] sm:$0xf]
        %v1350 = vld [vmem:[#allocation10 + $0x34] sm:$0xf]
        %v1351 = vld [vmem:[#allocation10 + $0x38] sm:$0xf]
        %v1352 = vld [vmem:[#allocation10 + $0x3c] sm:$0xf]
        %v1353 = vld [vmem:[#allocation10 + $0x40] sm:$0xf]
        %v1354 = vld [vmem:[#allocation10 + $0x44] sm:$0xf]
        %v1355 = vld [vmem:[#allocation10 + $0x48] sm:$0xf]
        %v1356 = vld [vmem:[#allocation10 + $0x4c] sm:$0xf]
        %v1357 = vld [vmem:[#allocation10 + $0x50] sm:$0xf]
        %v1358 = vld [vmem:[#allocation10 + $0x54] sm:$0xf]
        %v1359 = vld [vmem:[#allocation10 + $0x58] sm:$0xf]
        %v1360 = vld [vmem:[#allocation10 + $0x5c] sm:$0xf]
        %v1361 = vld [vmem:[#allocation10 + $0x60] sm:$0xf]
        %v1362 = vld [vmem:[#allocation10 + $0x64] sm:$0xf]
        %v1363 = vld [vmem:[#allocation10 + $0x68] sm:$0xf]
        %v1364 = vld [vmem:[#allocation10 + $0x6c] sm:$0xf]
        %v1365 = vld [vmem:[#allocation10 + $0x70] sm:$0xf]
        %v1366 = vld [vmem:[#allocation10 + $0x74] sm:$0xf]
        %v1367 = vld [vmem:[#allocation10 + $0x78] sm:$0xf]
        %v1368 = vld [vmem:[#allocation10 + $0x7c] sm:$0xf]
        %v1369 = vld [vmem:[#allocation10 + $0x80] sm:$0xf]
        %v1370 = vld [vmem:[#allocation10 + $0x84] sm:$0xf]
        %v1371 = vld [vmem:[#allocation10 + $0x88] sm:$0xf]
        %v1372 = vld [vmem:[#allocation10 + $0x8c] sm:$0xf]
        %v1373 = vld [vmem:[#allocation10 + $0x90] sm:$0xf]
        %v1374 = vld [vmem:[#allocation10 + $0x94] sm:$0xf]
        %v1375 = vld [vmem:[#allocation10 + $0x98] sm:$0xf]
        %v1376 = vld [vmem:[#allocation10 + $0x9c] sm:$0xf]
        %v1377 = vld [vmem:[#allocation10 + $0xa0] sm:$0xf]
        %v1378 = vld [vmem:[#allocation10 + $0xa4] sm:$0xf]
        %v1379 = vld [vmem:[#allocation10 + $0xa8] sm:$0xf]
        %v1380 = vld [vmem:[#allocation10 + $0xac] sm:$0xf]
        %v1381 = vld [vmem:[#allocation10 + $0xb0] sm:$0xf]
        %v1382 = vld [vmem:[#allocation10 + $0xb4] sm:$0xf]
        %v1383 = vld [vmem:[#allocation10 + $0xb8] sm:$0xf]
        %v1384 = vld [vmem:[#allocation10 + $0xbc] sm:$0xf]
        %v1385 = vld [vmem:[#allocation10 + $0xc0] sm:$0xf]
        %v1386 = vld [vmem:[#allocation10 + $0xc4] sm:$0xf]
        %v1387 = vld [vmem:[#allocation10 + $0xc8] sm:$0xf]
        %v1388 = vld [vmem:[#allocation10 + $0xcc] sm:$0xf]
        %v1389 = vld [vmem:[#allocation10 + $0xd0] sm:$0xf]
        %v1390 = vld [vmem:[#allocation10 + $0xd4] sm:$0xf]
        %v1391 = vld [vmem:[#allocation10 + $0xd8] sm:$0xf]
        %v1392 = vld [vmem:[#allocation10 + $0xdc] sm:$0xf]
        %v1393 = vld [vmem:[#allocation10 + $0xe0] sm:$0xf]
        %v1394 = vld [vmem:[#allocation10 + $0xe4] sm:$0xf]
        %v1395 = vld [vmem:[#allocation10 + $0xe8] sm:$0xf]
        %v1396 = vld [vmem:[#allocation10 + $0xec] sm:$0xf]
        %v1397 = vld [vmem:[#allocation10 + $0xf0] sm:$0xf]
        %v1398 = vld [vmem:[#allocation10 + $0xf4] sm:$0xf]
        %v1399 = vld [vmem:[#allocation10 + $0xf8] sm:$0xf]
        %v1400 = vld [vmem:[#allocation10 + $0xfc] sm:$0xf]
        %v1403 = vunpack.c.l.b16 %v1335
        %v1404 = vunpack.c.h.b16 %v1335
        %v1405 = vunpack.c.l.b16 %v1336
        %v1406 = vunpack.c.h.b16 %v1336
        %v1407 = vpack.c.b16 %v1405, %v1403
        %v1408 = vpack.c.b16 %v1406, %v1404
        %v1443 = vunpack.c.l.b16 %v1369
        %v1444 = vunpack.c.l.b16 %v1370
        %v1445 = vunpack.c.l.b16 %v1371
        %v1446 = vunpack.c.l.b16 %v1372
        %v1447 = vunpack.c.l.b16 %v1373
        %v1448 = vunpack.c.l.b16 %v1374
        %v1449 = vunpack.c.l.b16 %v1375
        %v1450 = vunpack.c.l.b16 %v1376
        %v1451 = vunpack.c.l.b16 %v1377
        %v1452 = vunpack.c.l.b16 %v1378
        %v1453 = vunpack.c.l.b16 %v1379
        %v1454 = vunpack.c.l.b16 %v1380
        %v1455 = vunpack.c.l.b16 %v1381
        %v1456 = vunpack.c.l.b16 %v1382
        %v1457 = vunpack.c.l.b16 %v1383
        %v1458 = vunpack.c.l.b16 %v1384
        %v1459 = vunpack.c.l.b16 %v1385
        %v1460 = vunpack.c.l.b16 %v1386
        %v1461 = vunpack.c.l.b16 %v1387
        %v1462 = vunpack.c.l.b16 %v1388
        %v1463 = vunpack.c.l.b16 %v1389
        %v1464 = vunpack.c.l.b16 %v1390
        %v1465 = vunpack.c.l.b16 %v1391
        %v1466 = vunpack.c.l.b16 %v1392
        %v1467 = vunpack.c.l.b16 %v1393
        %v1468 = vunpack.c.l.b16 %v1394
        %v1469 = vunpack.c.l.b16 %v1395
        %v1470 = vunpack.c.l.b16 %v1396
        %v1471 = vunpack.c.l.b16 %v1397
        %v1472 = vunpack.c.l.b16 %v1398
        %v1473 = vunpack.c.l.b16 %v1399
        %v1474 = vunpack.c.l.b16 %v1400
        %v1475 = vpack.c.b16 %v1444, %v1443
        %v1476 = vpack.c.b16 %v1446, %v1445
        %v1477 = vpack.c.b16 %v1448, %v1447
        %v1478 = vpack.c.b16 %v1450, %v1449
        %v1479 = vpack.c.b16 %v1452, %v1451
        %v1480 = vpack.c.b16 %v1454, %v1453
        %v1481 = vpack.c.b16 %v1456, %v1455
        %v1482 = vpack.c.b16 %v1458, %v1457
        %v1483 = vpack.c.b16 %v1460, %v1459
        %v1484 = vpack.c.b16 %v1462, %v1461
        %v1485 = vpack.c.b16 %v1464, %v1463
        %v1486 = vpack.c.b16 %v1466, %v1465
        %v1487 = vpack.c.b16 %v1468, %v1467
        %v1488 = vpack.c.b16 %v1470, %v1469
        %v1489 = vpack.c.b16 %v1472, %v1471
        %v1490 = vpack.c.b16 %v1474, %v1473
        %1507 = vmatprep.subr.bf16.mxu0 0
        %1508 = vmatpush1.bf16.msra.mxu0 %v1475
        %1509 = vmatprep.subr.bf16.mxu0 0
        %1510 = vmatpush1.bf16.msra.mxu0 %v1476
        %1511 = vmatprep.subr.bf16.mxu0 0
        %1512 = vmatpush1.bf16.msra.mxu0 %v1477
        %1513 = vmatprep.subr.bf16.mxu0 0
        %1514 = vmatpush1.bf16.msra.mxu0 %v1478
        %1515 = vmatprep.subr.bf16.mxu0 0
        %1516 = vmatpush1.bf16.msra.mxu0 %v1479
        %1517 = vmatprep.subr.bf16.mxu0 0
        %1518 = vmatpush1.bf16.msra.mxu0 %v1480
        %1519 = vmatprep.subr.bf16.mxu0 0
        %1520 = vmatpush1.bf16.msra.mxu0 %v1481
        %1521 = vmatprep.subr.bf16.mxu0 0
        %1522 = vmatpush1.bf16.msra.mxu0 %v1482
        %1523 = vmatprep.subr.bf16.mxu0 0
        %1524 = vmatpush1.bf16.msra.mxu0 %v1483
        %1525 = vmatprep.subr.bf16.mxu0 0
        %1526 = vmatpush1.bf16.msra.mxu0 %v1484
        %1527 = vmatprep.subr.bf16.mxu0 0
        %1528 = vmatpush1.bf16.msra.mxu0 %v1485
        %1529 = vmatprep.subr.bf16.mxu0 0
        %1530 = vmatpush1.bf16.msra.mxu0 %v1486
        %1531 = vmatprep.subr.bf16.mxu0 0
        %1532 = vmatpush1.bf16.msra.mxu0 %v1487
        %1533 = vmatprep.subr.bf16.mxu0 0
        %1534 = vmatpush1.bf16.msra.mxu0 %v1488
        %1535 = vmatprep.subr.bf16.mxu0 0
        %1536 = vmatpush1.bf16.msra.mxu0 %v1489
        %1537 = vmatprep.subr.bf16.mxu0 0
        %1538 = vmatpush1.bf16.msra.mxu0 %v1490
        %1539 = vmatprep.mubr.bf16.mxu0 %v1408
        %1540 = vmatmul.mubr.bf16.gmra.mrb[0].mxu0 %v1407
        %v1541 = vpop.f32.mrb[0].mxu0
        %v1542 = vadd.f32 0.0, %v1541
        %v1543 = vpop.f32.mrb[0].mxu0
        %v1544 = vpop.f32.mrb[0].mxu0
        %v1545 = vadd.f32 0.0, %v1544
        %v1546 = vpop.f32.mrb[0].mxu0
        %1547 = vdwg.mxu0
        %v1549 = vunpack.c.l.b16 %v1334
        %v1550 = vunpack.c.h.b16 %v1334
        %v1551 = vpack.c.b16 %v1403, %v1549
        %v1552 = vpack.c.b16 %v1404, %v1550
        %v1553 = vpack.c.b16 %v1405, %v1405
        %v1554 = vpack.c.b16 %v1406, %v1406
        %v1556 = vshrl.u32 %v1551, 16
        %v1558 = vrot.slane %v1556, 3
        %v1559 = vshll.u32 %v1551, 16
        %v1561 = vrot.slane %v1559, 4
        %v1562 = vor.u32 %v1558, %v1561
        %v1564 = vshrl.u32 %v1553, 16
        %v1566 = vrot.slane %v1564, 3
        %v1567 = vshll.u32 %v1553, 16
        %v1569 = vrot.slane %v1567, 4
        %v1570 = vor.u32 %v1566, %v1569
        %v1571 = vsel %vm543, %v1562, %v1570
        %v1573 = vshrl.u32 %v1552, 16
        %v1575 = vrot.slane %v1573, 3
        %v1576 = vshll.u32 %v1552, 16
        %v1578 = vrot.slane %v1576, 4
        %v1579 = vor.u32 %v1575, %v1578
        %v1581 = vshrl.u32 %v1554, 16
        %v1583 = vrot.slane %v1581, 3
        %v1584 = vshll.u32 %v1554, 16
        %v1586 = vrot.slane %v1584, 4
        %v1587 = vor.u32 %v1583, %v1586
        %v1588 = vsel %vm543, %v1579, %v1587
        %v1623 = vunpack.c.l.b16 %v1337
        %v1624 = vunpack.c.l.b16 %v1338
        %v1625 = vunpack.c.l.b16 %v1339
        %v1626 = vunpack.c.l.b16 %v1340
        %v1627 = vunpack.c.l.b16 %v1341
        %v1628 = vunpack.c.l.b16 %v1342
        %v1629 = vunpack.c.l.b16 %v1343
        %v1630 = vunpack.c.l.b16 %v1344
        %v1631 = vunpack.c.l.b16 %v1345
        %v1632 = vunpack.c.l.b16 %v1346
        %v1633 = vunpack.c.l.b16 %v1347
        %v1634 = vunpack.c.l.b16 %v1348
        %v1635 = vunpack.c.l.b16 %v1349
        %v1636 = vunpack.c.l.b16 %v1350
        %v1637 = vunpack.c.l.b16 %v1351
        %v1638 = vunpack.c.l.b16 %v1352
        %v1639 = vunpack.c.l.b16 %v1353
        %v1640 = vunpack.c.l.b16 %v1354
        %v1641 = vunpack.c.l.b16 %v1355
        %v1642 = vunpack.c.l.b16 %v1356
        %v1643 = vunpack.c.l.b16 %v1357
        %v1644 = vunpack.c.l.b16 %v1358
        %v1645 = vunpack.c.l.b16 %v1359
        %v1646 = vunpack.c.l.b16 %v1360
        %v1647 = vunpack.c.l.b16 %v1361
        %v1648 = vunpack.c.l.b16 %v1362
        %v1649 = vunpack.c.l.b16 %v1363
        %v1650 = vunpack.c.l.b16 %v1364
        %v1651 = vunpack.c.l.b16 %v1365
        %v1652 = vunpack.c.l.b16 %v1366
        %v1653 = vunpack.c.l.b16 %v1367
        %v1654 = vunpack.c.l.b16 %v1368
        %v1655 = vpack.c.b16 %v1624, %v1623
        %v1656 = vpack.c.b16 %v1626, %v1625
        %v1657 = vpack.c.b16 %v1628, %v1627
        %v1658 = vpack.c.b16 %v1630, %v1629
        %v1659 = vpack.c.b16 %v1632, %v1631
        %v1660 = vpack.c.b16 %v1634, %v1633
        %v1661 = vpack.c.b16 %v1636, %v1635
        %v1662 = vpack.c.b16 %v1638, %v1637
        %v1663 = vpack.c.b16 %v1640, %v1639
        %v1664 = vpack.c.b16 %v1642, %v1641
        %v1665 = vpack.c.b16 %v1644, %v1643
        %v1666 = vpack.c.b16 %v1646, %v1645
        %v1667 = vpack.c.b16 %v1648, %v1647
        %v1668 = vpack.c.b16 %v1650, %v1649
        %v1669 = vpack.c.b16 %v1652, %v1651
        %v1670 = vpack.c.b16 %v1654, %v1653
        %1687 = vmatprep.subr.bf16.mxu0 0
        %1688 = vmatpush1.bf16.msra.mxu0 %v1655
        %1689 = vmatprep.subr.bf16.mxu0 0
        %1690 = vmatpush1.bf16.msra.mxu0 %v1656
        %1691 = vmatprep.subr.bf16.mxu0 0
        %1692 = vmatpush1.bf16.msra.mxu0 %v1657
        %1693 = vmatprep.subr.bf16.mxu0 0
        %1694 = vmatpush1.bf16.msra.mxu0 %v1658
        %1695 = vmatprep.subr.bf16.mxu0 0
        %1696 = vmatpush1.bf16.msra.mxu0 %v1659
        %1697 = vmatprep.subr.bf16.mxu0 0
        %1698 = vmatpush1.bf16.msra.mxu0 %v1660
        %1699 = vmatprep.subr.bf16.mxu0 0
        %1700 = vmatpush1.bf16.msra.mxu0 %v1661
        %1701 = vmatprep.subr.bf16.mxu0 0
        %1702 = vmatpush1.bf16.msra.mxu0 %v1662
        %1703 = vmatprep.subr.bf16.mxu0 0
        %1704 = vmatpush1.bf16.msra.mxu0 %v1663
        %1705 = vmatprep.subr.bf16.mxu0 0
        %1706 = vmatpush1.bf16.msra.mxu0 %v1664
        %1707 = vmatprep.subr.bf16.mxu0 0
        %1708 = vmatpush1.bf16.msra.mxu0 %v1665
        %1709 = vmatprep.subr.bf16.mxu0 0
        %1710 = vmatpush1.bf16.msra.mxu0 %v1666
        %1711 = vmatprep.subr.bf16.mxu0 0
        %1712 = vmatpush1.bf16.msra.mxu0 %v1667
        %1713 = vmatprep.subr.bf16.mxu0 0
        %1714 = vmatpush1.bf16.msra.mxu0 %v1668
        %1715 = vmatprep.subr.bf16.mxu0 0
        %1716 = vmatpush1.bf16.msra.mxu0 %v1669
        %1717 = vmatprep.subr.bf16.mxu0 0
        %1718 = vmatpush1.bf16.msra.mxu0 %v1670
        %1719 = vmatprep.mubr.bf16.mxu0 %v1588
        %1720 = vmatmul.mubr.bf16.gmra.mrb[0].mxu0 %v1571
        %v1721 = vpop.f32.mrb[0].mxu0
        %v1722 = vadd.f32 %v1542, %v1721
        %v1723 = vpop.f32.mrb[0].mxu0
        %v1724 = vpop.f32.mrb[0].mxu0
        %v1725 = vadd.f32 %v1545, %v1724
        %v1726 = vpop.f32.mrb[0].mxu0
        %1727 = vdwg.mxu0
        %v1728 = vld [vmem:[#allocation3 + $0x10] sm:$0xff]
        %v1729 = vld [vmem:[#allocation3 + $0x18] sm:$0xff]
        %v1730 = vld [vmem:[#allocation3 + $0x20] sm:$0x11]
        %v1731 = vld [vmem:[#allocation10 + $0x100] sm:$0xf]
        %v1732 = vld [vmem:[#allocation10 + $0x104] sm:$0xf]
        %v1733 = vld [vmem:[#allocation10 + $0x108] sm:$0xf]
        %v1734 = vld [vmem:[#allocation10 + $0x10c] sm:$0xf]
        %v1735 = vld [vmem:[#allocation10 + $0x110] sm:$0xf]
        %v1736 = vld [vmem:[#allocation10 + $0x114] sm:$0xf]
        %v1737 = vld [vmem:[#allocation10 + $0x118] sm:$0xf]
        %v1738 = vld [vmem:[#allocation10 + $0x11c] sm:$0xf]
        %v1739 = vld [vmem:[#allocation10 + $0x120] sm:$0xf]
        %v1740 = vld [vmem:[#allocation10 + $0x124] sm:$0xf]
        %v1741 = vld [vmem:[#allocation10 + $0x128] sm:$0xf]
        %v1742 = vld [vmem:[#allocation10 + $0x12c] sm:$0xf]
        %v1743 = vld [vmem:[#allocation10 + $0x130] sm:$0xf]
        %v1744 = vld [vmem:[#allocation10 + $0x134] sm:$0xf]
        %v1745 = vld [vmem:[#allocation10 + $0x138] sm:$0xf]
        %v1746 = vld [vmem:[#allocation10 + $0x13c] sm:$0xf]
        %v1747 = vld [vmem:[#allocation10 + $0x140] sm:$0xf]
        %v1748 = vld [vmem:[#allocation10 + $0x144] sm:$0xf]
        %v1749 = vld [vmem:[#allocation10 + $0x148] sm:$0xf]
        %v1750 = vld [vmem:[#allocation10 + $0x14c] sm:$0xf]
        %v1751 = vld [vmem:[#allocation10 + $0x150] sm:$0xf]
        %v1752 = vld [vmem:[#allocation10 + $0x154] sm:$0xf]
        %v1753 = vld [vmem:[#allocation10 + $0x158] sm:$0xf]
        %v1754 = vld [vmem:[#allocation10 + $0x15c] sm:$0xf]
        %v1755 = vld [vmem:[#allocation10 + $0x160] sm:$0xf]
        %v1756 = vld [vmem:[#allocation10 + $0x164] sm:$0xf]
        %v1757 = vld [vmem:[#allocation10 + $0x168] sm:$0xf]
        %v1758 = vld [vmem:[#allocation10 + $0x16c] sm:$0xf]
        %v1759 = vld [vmem:[#allocation10 + $0x170] sm:$0xf]
        %v1760 = vld [vmem:[#allocation10 + $0x174] sm:$0xf]
        %v1761 = vld [vmem:[#allocation10 + $0x178] sm:$0xf]
        %v1762 = vld [vmem:[#allocation10 + $0x17c] sm:$0xf]
        %v1766 = vunpack.c.l.b16 %v1728
        %v1767 = vunpack.c.h.b16 %v1728
        %v1768 = vunpack.c.l.b16 %v1729
        %v1769 = vunpack.c.h.b16 %v1729
        %v1770 = vunpack.c.l.b16 %v1730
        %v1771 = vunpack.c.h.b16 %v1730
        %v1772 = vpack.c.b16 %v1768, %v1766
        %v1773 = vpack.c.b16 %v1769, %v1767
        %v1774 = vpack.c.b16 %v1770, %v1770
        %v1775 = vpack.c.b16 %v1771, %v1771
        %v1777 = vshrl.u32 %v1772, 16
        %v1779 = vshll.u32 %v1772, 16
        %v1781 = vrot.slane %v1779, 1
        %v1782 = vor.u32 %v1777, %v1781
        %v1784 = vshll.u32 %v1774, 16
        %v1786 = vrot.slane %v1784, 1
        %v1787 = vsel %vm988, %v1782, %v1786
        %v1789 = vshrl.u32 %v1773, 16
        %v1791 = vshll.u32 %v1773, 16
        %v1793 = vrot.slane %v1791, 1
        %v1794 = vor.u32 %v1789, %v1793
        %v1796 = vshll.u32 %v1775, 16
        %v1798 = vrot.slane %v1796, 1
        %v1799 = vsel %vm988, %v1794, %v1798
        %v1834 = vunpack.c.l.b16 %v1731
        %v1835 = vunpack.c.l.b16 %v1732
        %v1836 = vunpack.c.l.b16 %v1733
        %v1837 = vunpack.c.l.b16 %v1734
        %v1838 = vunpack.c.l.b16 %v1735
        %v1839 = vunpack.c.l.b16 %v1736
        %v1840 = vunpack.c.l.b16 %v1737
        %v1841 = vunpack.c.l.b16 %v1738
        %v1842 = vunpack.c.l.b16 %v1739
        %v1843 = vunpack.c.l.b16 %v1740
        %v1844 = vunpack.c.l.b16 %v1741
        %v1845 = vunpack.c.l.b16 %v1742
        %v1846 = vunpack.c.l.b16 %v1743
        %v1847 = vunpack.c.l.b16 %v1744
        %v1848 = vunpack.c.l.b16 %v1745
        %v1849 = vunpack.c.l.b16 %v1746
        %v1850 = vunpack.c.l.b16 %v1747
        %v1851 = vunpack.c.l.b16 %v1748
        %v1852 = vunpack.c.l.b16 %v1749
        %v1853 = vunpack.c.l.b16 %v1750
        %v1854 = vunpack.c.l.b16 %v1751
        %v1855 = vunpack.c.l.b16 %v1752
        %v1856 = vunpack.c.l.b16 %v1753
        %v1857 = vunpack.c.l.b16 %v1754
        %v1858 = vunpack.c.l.b16 %v1755
        %v1859 = vunpack.c.l.b16 %v1756
        %v1860 = vunpack.c.l.b16 %v1757
        %v1861 = vunpack.c.l.b16 %v1758
        %v1862 = vunpack.c.l.b16 %v1759
        %v1863 = vunpack.c.l.b16 %v1760
        %v1864 = vunpack.c.l.b16 %v1761
        %v1865 = vunpack.c.l.b16 %v1762
        %v1866 = vpack.c.b16 %v1835, %v1834
        %v1867 = vpack.c.b16 %v1837, %v1836
        %v1868 = vpack.c.b16 %v1839, %v1838
        %v1869 = vpack.c.b16 %v1841, %v1840
        %v1870 = vpack.c.b16 %v1843, %v1842
        %v1871 = vpack.c.b16 %v1845, %v1844
        %v1872 = vpack.c.b16 %v1847, %v1846
        %v1873 = vpack.c.b16 %v1849, %v1848
        %v1874 = vpack.c.b16 %v1851, %v1850
        %v1875 = vpack.c.b16 %v1853, %v1852
        %v1876 = vpack.c.b16 %v1855, %v1854
        %v1877 = vpack.c.b16 %v1857, %v1856
        %v1878 = vpack.c.b16 %v1859, %v1858
        %v1879 = vpack.c.b16 %v1861, %v1860
        %v1880 = vpack.c.b16 %v1863, %v1862
        %v1881 = vpack.c.b16 %v1865, %v1864
        %1898 = vmatprep.subr.bf16.mxu0 0
        %1899 = vmatpush1.bf16.msra.mxu0 %v1866
        %1900 = vmatprep.subr.bf16.mxu0 0
        %1901 = vmatpush1.bf16.msra.mxu0 %v1867
        %1902 = vmatprep.subr.bf16.mxu0 0
        %1903 = vmatpush1.bf16.msra.mxu0 %v1868
        %1904 = vmatprep.subr.bf16.mxu0 0
        %1905 = vmatpush1.bf16.msra.mxu0 %v1869
        %1906 = vmatprep.subr.bf16.mxu0 0
        %1907 = vmatpush1.bf16.msra.mxu0 %v1870
        %1908 = vmatprep.subr.bf16.mxu0 0
        %1909 = vmatpush1.bf16.msra.mxu0 %v1871
        %1910 = vmatprep.subr.bf16.mxu0 0
        %1911 = vmatpush1.bf16.msra.mxu0 %v1872
        %1912 = vmatprep.subr.bf16.mxu0 0
        %1913 = vmatpush1.bf16.msra.mxu0 %v1873
        %1914 = vmatprep.subr.bf16.mxu0 0
        %1915 = vmatpush1.bf16.msra.mxu0 %v1874
        %1916 = vmatprep.subr.bf16.mxu0 0
        %1917 = vmatpush1.bf16.msra.mxu0 %v1875
        %1918 = vmatprep.subr.bf16.mxu0 0
        %1919 = vmatpush1.bf16.msra.mxu0 %v1876
        %1920 = vmatprep.subr.bf16.mxu0 0
        %1921 = vmatpush1.bf16.msra.mxu0 %v1877
        %1922 = vmatprep.subr.bf16.mxu0 0
        %1923 = vmatpush1.bf16.msra.mxu0 %v1878
        %1924 = vmatprep.subr.bf16.mxu0 0
        %1925 = vmatpush1.bf16.msra.mxu0 %v1879
        %1926 = vmatprep.subr.bf16.mxu0 0
        %1927 = vmatpush1.bf16.msra.mxu0 %v1880
        %1928 = vmatprep.subr.bf16.mxu0 0
        %1929 = vmatpush1.bf16.msra.mxu0 %v1881
        %1930 = vmatprep.mubr.bf16.mxu0 %v1799
        %1931 = vmatmul.mubr.bf16.gmra.mrb[0].mxu0 %v1787
        %v1932 = vpop.f32.mrb[0].mxu0
        %v1933 = vadd.f32 0.0, %v1932
        %v1934 = vpop.f32.mrb[0].mxu0
        %v1935 = vpop.f32.mrb[0].mxu0
        %v1936 = vadd.f32 0.0, %v1935
        %v1937 = vpop.f32.mrb[0].mxu0
        %1938 = vdwg.mxu0
        %v1939 = vadd.f32 %v1722, %v1933
        %v1940 = vadd.f32 %v1725, %v1936
        %v1941 = vld [vmem:[%s6] sm:$0x1]
        %v1943 = vlaneseq
        %v1944 = vshrl.u32 %v1943, 7
        %v1945 = vsub.s32 0, %v1944
        %v1946 = vrot.slane %v1941, %v1945
        %v1948 = vadd.f32 %v1939, %v1946
        %v1949 = vadd.f32 %v1940, %v1946
        %v1950 = vmax.f32 %v1948, 0.0
        %v1951 = vmax.f32 %v1949, 0.0
        %v1952 = vadd.f32 %v1950, %v1951
        %v1953 = vrot.slane %v1952, 4
        %v1954 = vadd.f32 %v1952, %v1953
        %v1955 = vrot.slane %v1954, 2
        %v1956 = vadd.f32 %v1954, %v1955
        %v1957 = vrot.slane %v1956, 1
        %v1958 = vadd.f32 %v1956, %v1957
        %v1959 = vld [vmem:[#allocation12] sm:$0xff]
        %v1960 = vld [vmem:[#allocation12 + $0x8] sm:$0xff]
        %v1961 = vld [vmem:[#allocation12 + $0x10] sm:$0xff]
        %v1962 = vld [vmem:[#allocation12 + $0x18] sm:$0xff]
        %v1963 = vld [vmem:[#allocation12 + $0x20] sm:$0xff]
        %v1964 = vld [vmem:[#allocation12 + $0x28] sm:$0xff]
        %v1965 = vld [vmem:[#allocation12 + $0x30] sm:$0xff]
        %v1966 = vld [vmem:[#allocation12 + $0x38] sm:$0xff]
        %v1967 = vld [vmem:[#allocation12 + $0x40] sm:$0xff]
        %v1968 = vld [vmem:[#allocation12 + $0x48] sm:$0xff]
        %v1969 = vld [vmem:[#allocation12 + $0x50] sm:$0xff]
        %v1970 = vld [vmem:[#allocation12 + $0x58] sm:$0xff]
        %v1971 = vld [vmem:[#allocation12 + $0x60] sm:$0xff]
        %v1972 = vld [vmem:[#allocation12 + $0x68] sm:$0xff]
        %v1973 = vld [vmem:[#allocation12 + $0x70] sm:$0xff]
        %v1974 = vld [vmem:[#allocation12 + $0x78] sm:$0xff]
        %v1975 = vld [vmem:[%s8] sm:$0x1]
        %1976 = vmatprep.subr.mxu0 0.0
        %1977 = vmatpush1.msra.mxu0 %v1959
        %1978 = vmatprep.subr.mxu0 0.0
        %1979 = vmatpush1.msra.mxu0 %v1960
        %1980 = vmatprep.subr.mxu0 0.0
        %1981 = vmatpush1.msra.mxu0 %v1961
        %1982 = vmatprep.subr.mxu0 0.0
        %1983 = vmatpush1.msra.mxu0 %v1962
        %1984 = vmatprep.subr.mxu0 0.0
        %1985 = vmatpush1.msra.mxu0 %v1963
        %1986 = vmatprep.subr.mxu0 0.0
        %1987 = vmatpush1.msra.mxu0 %v1964
        %1988 = vmatprep.subr.mxu0 0.0
        %1989 = vmatpush1.msra.mxu0 %v1965
        %1990 = vmatprep.subr.mxu0 0.0
        %1991 = vmatpush1.msra.mxu0 %v1966
        %1992 = vmatprep.subr.mxu0 0.0
        %1993 = vmatpush1.msra.mxu0 %v1967
        %1994 = vmatprep.subr.mxu0 0.0
        %1995 = vmatpush1.msra.mxu0 %v1968
        %1996 = vmatprep.subr.mxu0 0.0
        %1997 = vmatpush1.msra.mxu0 %v1969
        %1998 = vmatprep.subr.mxu0 0.0
        %1999 = vmatpush1.msra.mxu0 %v1970
        %2000 = vmatprep.subr.mxu0 0.0
        %2001 = vmatpush1.msra.mxu0 %v1971
        %2002 = vmatprep.subr.mxu0 0.0
        %2003 = vmatpush1.msra.mxu0 %v1972
        %2004 = vmatprep.subr.mxu0 0.0
        %2005 = vmatpush1.msra.mxu0 %v1973
        %2006 = vmatprep.subr.mxu0 0.0
        %2007 = vmatpush1.msra.mxu0 %v1974
        %2008 = vmatprep.subr.mxu0 0.0
        %2009 = vmatpush1.msra.mxu0 0.0
        %2010 = vmatprep.subr.mxu0 0.0
        %2011 = vmatpush1.msra.mxu0 0.0
        %2012 = vmatprep.subr.mxu0 0.0
        %2013 = vmatpush1.msra.mxu0 0.0
        %2014 = vmatprep.subr.mxu0 0.0
        %2015 = vmatpush1.msra.mxu0 0.0
        %2016 = vmatprep.subr.mxu0 0.0
        %2017 = vmatpush1.msra.mxu0 0.0
        %2018 = vmatprep.subr.mxu0 0.0
        %2019 = vmatpush1.msra.mxu0 0.0
        %2020 = vmatprep.subr.mxu0 0.0
        %2021 = vmatpush1.msra.mxu0 0.0
        %2022 = vmatprep.subr.mxu0 0.0
        %2023 = vmatpush1.msra.mxu0 0.0
        %2024 = vmatprep.subr.mxu0 0.0
        %2025 = vmatpush1.msra.mxu0 0.0
        %2026 = vmatprep.subr.mxu0 0.0
        %2027 = vmatpush1.msra.mxu0 0.0
        %2028 = vmatprep.subr.mxu0 0.0
        %2029 = vmatpush1.msra.mxu0 0.0
        %2030 = vmatprep.subr.mxu0 0.0
        %2031 = vmatpush1.msra.mxu0 0.0
        %2032 = vmatprep.subr.mxu0 0.0
        %2033 = vmatpush1.msra.mxu0 0.0
        %2034 = vmatprep.subr.mxu0 0.0
        %2035 = vmatpush1.msra.mxu0 0.0
        %2036 = vmatprep.subr.mxu0 0.0
        %2037 = vmatpush1.msra.mxu0 0.0
        %2038 = vmatprep.subr.mxu0 0.0
        %2039 = vmatpush1.msra.mxu0 0.0
        %2040 = vmatprep.mubr.f32.mxu0 0.0
        %2041 = vmatmul.mubr.f32.gmra.mrb[0].mxu0 %v1958
        %v2042 = vpop.f32.mrb[0].mxu0
        %v2043 = vadd.f32 %v1975, %v2042
        %v2044 = vpop.f32.mrb[0].mxu0
        %2045 = vdwg.mxu0
        %2046 = vst [vmem:[%s407] sm:$0x1] %v2043
        %s2047 = sand.u32 %s230, 1
        %s2048 = scalar_lea.sflag [#allocation6], %s2047
        %s2049 = sand.u32 %s230, 1
        %s2050 = scalar_lea.vmem [#allocation13], %s2049
        // Predicated region
        $region77: #{tpu_custom_call.1} parent=55 // pred_check
          %p2051 = pneg %p240
        $region78: #{tpu_custom_call.1} parent=55 // pred_check_branch
          %2053 = sbr.rel (%p2051) target = $region80
        $region79: #{tpu_custom_call.1} parent=55 // pred_region
          %s2055 = ssub.s32 16, 16
          %2056 = vsyncadd %s2048, %s2055
          %s2057 = smul.addr %s28, 16
          %s2058 = scalar_lea.hbm %s9, %s2057
          %s2060 = sshll.u32 %s2050, 4
          %s2061 = int_to_ptr.vmem [resolvable:$true] %s2060
          %2063 = dma.vmem_to_hbm [thread:$0]  %s2061, 16, %s2058, %s2048
        $region80: #{tpu_custom_call.1} parent=55 // pred_fallthru
          _
      $region56: #{tpu_custom_call.1} parent=5 // pred_fallthru
        _
      %p2064 = scmp.le.s32.totalorder 2, %s23
      // Predicated region
      $region81: #{tpu_custom_call.1} parent=5 // pred_check
        %p2065 = pneg %p2064
      $region82: #{tpu_custom_call.1} parent=5 // pred_check_branch
        %2067 = sbr.rel (%p2065) target = $region84
      $region83: #{tpu_custom_call.1} parent=5 // pred_region
        %s2068 = ssub.s32 %s23, 2
        // Predicated region
        $region85: #{tpu_custom_call.1} parent=83 // pred_check
          %p2069 = pneg %p246
        $region86: #{tpu_custom_call.1} parent=83 // pred_check_branch
          %2071 = sbr.rel (%p2069) target = $region88
        $region87: #{tpu_custom_call.1} parent=83 // pred_region
          %s2072 = sand.u32 %s231, 1
          %s2073 = scalar_lea.sflag [#allocation6], %s2072
          %s2074 = sand.u32 %s231, 1
          %s2075 = scalar_lea.vmem [#allocation13], %s2074
          %2076 = dma.done %s2073, 16
        $region88: #{tpu_custom_call.1} parent=83 // pred_fallthru
          _
      $region84: #{tpu_custom_call.1} parent=5 // pred_fallthru
        _
    $region6: #{tpu_custom_call.1} parent=1 // loop_footer
      %s27 = sadd.s32 1, %s23
    $region7: #{tpu_custom_call.1} parent=1 // loop_footer_branch
      %22 = sbr.rel target = $region3
    $region8: #{tpu_custom_call.1} parent=1 // loop_exit
      _
    %2077 = vsyncpa [#allocation5], 1
    %s2078 = scalar_lea.sflag [#allocation5], 1
    %2079 = vsyncpa %s2078, 1
    %2080 = vsyncpa [#allocation8], 1
    %2081 = vsyncpa [#allocation11], 1
    %2082 = vsyncpa [#allocation6], 1
    %s2083 = scalar_lea.sflag [#allocation6], 1
    %2084 = vsyncpa %s2083, 1

</llo_original>
